<compile_context>
chip_gen: v7x
topology: tpu7x:2x2x1
jax: 0.10.0
libtpu: 0.0.40
codegen_flags: <defaults>
</compile_context>

<pallas_src>
import jax
import jax.numpy as jnp
from jax import lax
from jax.experimental import pallas as pl
from jax.experimental.pallas import tpu as pltpu


def _round_up(x, m):
    return (x + m - 1) // m * m


def cnn_kernel(x_ref, w_ref, b_ref, o_ref):
    # x_ref: (L, C_in, B)      input, batch on the lane axis
    # w_ref: (C_out, K*C_in)   im2col'd filter, tap-major / channel-minor
    # b_ref: (C_out, 1)
    # o_ref: (C_out, B)        pooled output, lane-dense
    length, c_in, b_tile = x_ref.shape
    c_out, kc = w_ref.shape
    k_size = kc // c_in
    l_out = length - k_size + 1            # 21 - 5 + 1 = 17

    wf = w_ref[...]                        # (C_out, K*C_in), resident across taps

    m = None
    for t in range(l_out):                 # static unroll (17 positions)
        # (K, C_in, B) window -> (K*C_in, B): merge of leading (untiled) dims,
        # pure reinterpretation, no data movement.
        rhs = x_ref[t:t + k_size].reshape(k_size * c_in, b_tile)
        z = jnp.dot(wf, rhs, preferred_element_type=jnp.float32)   # (C_out, B)
        m = z if m is None else jnp.maximum(m, z)

    # max_t(relu(z_t + b)) == relu(max_t(z_t) + b): bias is t-invariant and
    # relu is monotone, so bias + ReLU are applied once after the running max.
    out = jnp.maximum(m + b_ref[...], 0.0)
    o_ref[...] = out.astype(o_ref.dtype)


def cnn_forward(x, w, b, *, b_tile=512):
    """x: (N, C, L) f32, w: (C_out, C_in, K) f32, b: (C_out,) -> (N, C_out, 1)."""
    n, c_in, length = x.shape
    c_out, c_in_w, k_size = w.shape
    assert c_in == c_in_w

    # Batch tile: multiple of 128 (lane width), no larger than the padded batch.
    b_tile = max(128, _round_up(min(b_tile, _round_up(n, 128)), 128))
    n_pad = _round_up(n, b_tile)

    # (N, C, L) -> (L, C, N_pad): batch on the minor, lane-dense axis.
    x_t = jnp.transpose(x, (2, 1, 0))
    if n_pad != n:
        x_t = jnp.pad(x_t, ((0, 0), (0, 0), (0, n_pad - n)))

    # (C_out, C_in, K) -> (C_out, K*C_in), tap-major to match the window flatten.
    w_flat = jnp.transpose(w, (0, 2, 1)).reshape(c_out, k_size * c_in)
    b2 = b.reshape(c_out, 1).astype(jnp.float32)

    out_mat = pl.pallas_call(
        cnn_kernel,
        out_shape=jax.ShapeDtypeStruct((c_out, n_pad), x.dtype),
        grid=(n_pad // b_tile,),
        in_specs=[
            pl.BlockSpec((length, c_in, b_tile), lambda i: (0, 0, i)),
            pl.BlockSpec((c_out, k_size * c_in), lambda i: (0, 0)),
            pl.BlockSpec((c_out, 1), lambda i: (0, 0)),
        ],
        out_specs=pl.BlockSpec((c_out, b_tile), lambda i: (0, i)),
        compiler_params=pltpu.CompilerParams(
            dimension_semantics=("parallel",),
        ),
    )(x_t, w_flat, b2)

    # (C_out, N_pad) -> (N, C_out, 1): wrapper-side layout plumbing only.
    return jnp.transpose(out_mat[:, :n])[:, :, None]


def cnn_reference(x, w, b):
    """Pure-JAX reference of the PyTorch forward (for validation)."""
    conv = lax.conv_general_dilated(
        x, w, window_strides=(1,), padding="VALID",
        dimension_numbers=("NCH", "OIH", "NCH"),
    ) + b.reshape(1, -1, 1)
    return jnp.max(jnp.maximum(conv, 0.0), axis=-1, keepdims=True)


if __name__ == "__main__":
    num_filters = 32          # C_in == C_out
    m_word = 21               # fixed by the module
    filter_size = 5
    batch = 200               # e.g. flattened (batch * seq_len) words

    key = jax.random.PRNGKey(0)
    kx, kw, kb = jax.random.split(key, 3)

    x = jax.random.normal(kx, (batch, num_filters, m_word), dtype=jnp.float32)
    w = jax.random.normal(kw, (num_filters, num_filters, filter_size),
                          dtype=jnp.float32) * 0.1
    b = jax.random.normal(kb, (num_filters,), dtype=jnp.float32) * 0.1

    # b_tile=128 -> 2 grid steps and a padded remainder, exercising tiling.
    out = jax.block_until_ready(cnn_forward(x, w, b, b_tile=128))

    ref = cnn_reference(x, w, b)
    assert out.shape == (batch, num_filters, 1)
    assert jnp.allclose(out, ref, atol=5e-4, rtol=5e-4)

    print("KERNEL_OK")
</pallas_src>

<mosaic_0001>
module attributes {stable_mosaic.version = 11 : i64} {
  func.func @cnn_kernel(%arg0: i32, %arg1: memref<21x32x128xf32, #tpu.memory_space<vmem>>, %arg2: memref<32x160xf32, #tpu.memory_space<vmem>>, %arg3: memref<32x1xf32, #tpu.memory_space<vmem>>, %arg4: memref<32x128xf32, #tpu.memory_space<vmem>>) attributes {dimension_semantics = [#tpu.dimension_semantics<parallel>], iteration_bounds = array<i64: 2>, scalar_prefetch = 0 : i64, scratch_operands = 0 : i64, tpu.core_type = #tpu.core_type<tc>, window_params = [{transform_indices = @transform_0, window_bounds = array<i64: 21, 32, 128>}, {pipeline_mode = #tpu.pipeline_mode<synchronous>, transform_indices = @transform_1, window_bounds = array<i64: 32, 160>}, {pipeline_mode = #tpu.pipeline_mode<synchronous>, transform_indices = @transform_2, window_bounds = array<i64: 32, 1>}, {transform_indices = @transform_3, window_bounds = array<i64: 32, 128>}]} {
    %c0 = arith.constant 0 : index
    %c0_0 = arith.constant 0 : index
    %0 = vector.load %arg2[%c0, %c0_0] : memref<32x160xf32, #tpu.memory_space<vmem>>, vector<32x160xf32>
    %c0_1 = arith.constant 0 : index
    %c0_2 = arith.constant 0 : index
    %c0_3 = arith.constant 0 : index
    %1 = vector.load %arg1[%c0_1, %c0_2, %c0_3] : memref<21x32x128xf32, #tpu.memory_space<vmem>>, vector<5x32x128xf32>
    %2 = vector.shape_cast %1 : vector<5x32x128xf32> to vector<160x128xf32>
    %cst = arith.constant dense<0.000000e+00> : vector<32x128xf32>
    %3 = tpu.matmul %0, %2, %cst {dimension_numbers = #tpu.dot_dimension_numbers<[1], [0], [0], [1], [0, 0, 1, 1], [], []>} : vector<32x160xf32>, vector<160x128xf32>, vector<32x128xf32> -> vector<32x128xf32>
    %c1 = arith.constant 1 : index
    %c0_4 = arith.constant 0 : index
    %c0_5 = arith.constant 0 : index
    %4 = vector.load %arg1[%c1, %c0_4, %c0_5] : memref<21x32x128xf32, #tpu.memory_space<vmem>>, vector<5x32x128xf32>
    %5 = vector.shape_cast %4 : vector<5x32x128xf32> to vector<160x128xf32>
    %cst_6 = arith.constant dense<0.000000e+00> : vector<32x128xf32>
    %6 = tpu.matmul %0, %5, %cst_6 {dimension_numbers = #tpu.dot_dimension_numbers<[1], [0], [0], [1], [0, 0, 1, 1], [], []>} : vector<32x160xf32>, vector<160x128xf32>, vector<32x128xf32> -> vector<32x128xf32>
    %7 = arith.maximumf %3, %6 : vector<32x128xf32>
    %c2 = arith.constant 2 : index
    %c0_7 = arith.constant 0 : index
    %c0_8 = arith.constant 0 : index
    %8 = vector.load %arg1[%c2, %c0_7, %c0_8] : memref<21x32x128xf32, #tpu.memory_space<vmem>>, vector<5x32x128xf32>
    %9 = vector.shape_cast %8 : vector<5x32x128xf32> to vector<160x128xf32>
    %cst_9 = arith.constant dense<0.000000e+00> : vector<32x128xf32>
    %10 = tpu.matmul %0, %9, %cst_9 {dimension_numbers = #tpu.dot_dimension_numbers<[1], [0], [0], [1], [0, 0, 1, 1], [], []>} : vector<32x160xf32>, vector<160x128xf32>, vector<32x128xf32> -> vector<32x128xf32>
    %11 = arith.maximumf %7, %10 : vector<32x128xf32>
    %c3 = arith.constant 3 : index
    %c0_10 = arith.constant 0 : index
    %c0_11 = arith.constant 0 : index
    %12 = vector.load %arg1[%c3, %c0_10, %c0_11] : memref<21x32x128xf32, #tpu.memory_space<vmem>>, vector<5x32x128xf32>
    %13 = vector.shape_cast %12 : vector<5x32x128xf32> to vector<160x128xf32>
    %cst_12 = arith.constant dense<0.000000e+00> : vector<32x128xf32>
    %14 = tpu.matmul %0, %13, %cst_12 {dimension_numbers = #tpu.dot_dimension_numbers<[1], [0], [0], [1], [0, 0, 1, 1], [], []>} : vector<32x160xf32>, vector<160x128xf32>, vector<32x128xf32> -> vector<32x128xf32>
    %15 = arith.maximumf %11, %14 : vector<32x128xf32>
    %c4 = arith.constant 4 : index
    %c0_13 = arith.constant 0 : index
    %c0_14 = arith.constant 0 : index
    %16 = vector.load %arg1[%c4, %c0_13, %c0_14] : memref<21x32x128xf32, #tpu.memory_space<vmem>>, vector<5x32x128xf32>
    %17 = vector.shape_cast %16 : vector<5x32x128xf32> to vector<160x128xf32>
    %cst_15 = arith.constant dense<0.000000e+00> : vector<32x128xf32>
    %18 = tpu.matmul %0, %17, %cst_15 {dimension_numbers = #tpu.dot_dimension_numbers<[1], [0], [0], [1], [0, 0, 1, 1], [], []>} : vector<32x160xf32>, vector<160x128xf32>, vector<32x128xf32> -> vector<32x128xf32>
    %19 = arith.maximumf %15, %18 : vector<32x128xf32>
    %c5 = arith.constant 5 : index
    %c0_16 = arith.constant 0 : index
    %c0_17 = arith.constant 0 : index
    %20 = vector.load %arg1[%c5, %c0_16, %c0_17] : memref<21x32x128xf32, #tpu.memory_space<vmem>>, vector<5x32x128xf32>
    %21 = vector.shape_cast %20 : vector<5x32x128xf32> to vector<160x128xf32>
    %cst_18 = arith.constant dense<0.000000e+00> : vector<32x128xf32>
    %22 = tpu.matmul %0, %21, %cst_18 {dimension_numbers = #tpu.dot_dimension_numbers<[1], [0], [0], [1], [0, 0, 1, 1], [], []>} : vector<32x160xf32>, vector<160x128xf32>, vector<32x128xf32> -> vector<32x128xf32>
    %23 = arith.maximumf %19, %22 : vector<32x128xf32>
    %c6 = arith.constant 6 : index
    %c0_19 = arith.constant 0 : index
    %c0_20 = arith.constant 0 : index
    %24 = vector.load %arg1[%c6, %c0_19, %c0_20] : memref<21x32x128xf32, #tpu.memory_space<vmem>>, vector<5x32x128xf32>
    %25 = vector.shape_cast %24 : vector<5x32x128xf32> to vector<160x128xf32>
    %cst_21 = arith.constant dense<0.000000e+00> : vector<32x128xf32>
    %26 = tpu.matmul %0, %25, %cst_21 {dimension_numbers = #tpu.dot_dimension_numbers<[1], [0], [0], [1], [0, 0, 1, 1], [], []>} : vector<32x160xf32>, vector<160x128xf32>, vector<32x128xf32> -> vector<32x128xf32>
    %27 = arith.maximumf %23, %26 : vector<32x128xf32>
    %c7 = arith.constant 7 : index
    %c0_22 = arith.constant 0 : index
    %c0_23 = arith.constant 0 : index
    %28 = vector.load %arg1[%c7, %c0_22, %c0_23] : memref<21x32x128xf32, #tpu.memory_space<vmem>>, vector<5x32x128xf32>
    %29 = vector.shape_cast %28 : vector<5x32x128xf32> to vector<160x128xf32>
    %cst_24 = arith.constant dense<0.000000e+00> : vector<32x128xf32>
    %30 = tpu.matmul %0, %29, %cst_24 {dimension_numbers = #tpu.dot_dimension_numbers<[1], [0], [0], [1], [0, 0, 1, 1], [], []>} : vector<32x160xf32>, vector<160x128xf32>, vector<32x128xf32> -> vector<32x128xf32>
    %31 = arith.maximumf %27, %30 : vector<32x128xf32>
    %c8 = arith.constant 8 : index
    %c0_25 = arith.constant 0 : index
    %c0_26 = arith.constant 0 : index
    %32 = vector.load %arg1[%c8, %c0_25, %c0_26] : memref<21x32x128xf32, #tpu.memory_space<vmem>>, vector<5x32x128xf32>
    %33 = vector.shape_cast %32 : vector<5x32x128xf32> to vector<160x128xf32>
    %cst_27 = arith.constant dense<0.000000e+00> : vector<32x128xf32>
    %34 = tpu.matmul %0, %33, %cst_27 {dimension_numbers = #tpu.dot_dimension_numbers<[1], [0], [0], [1], [0, 0, 1, 1], [], []>} : vector<32x160xf32>, vector<160x128xf32>, vector<32x128xf32> -> vector<32x128xf32>
    %35 = arith.maximumf %31, %34 : vector<32x128xf32>
    %c9 = arith.constant 9 : index
    %c0_28 = arith.constant 0 : index
    %c0_29 = arith.constant 0 : index
    %36 = vector.load %arg1[%c9, %c0_28, %c0_29] : memref<21x32x128xf32, #tpu.memory_space<vmem>>, vector<5x32x128xf32>
    %37 = vector.shape_cast %36 : vector<5x32x128xf32> to vector<160x128xf32>
    %cst_30 = arith.constant dense<0.000000e+00> : vector<32x128xf32>
    %38 = tpu.matmul %0, %37, %cst_30 {dimension_numbers = #tpu.dot_dimension_numbers<[1], [0], [0], [1], [0, 0, 1, 1], [], []>} : vector<32x160xf32>, vector<160x128xf32>, vector<32x128xf32> -> vector<32x128xf32>
    %39 = arith.maximumf %35, %38 : vector<32x128xf32>
    %c10 = arith.constant 10 : index
    %c0_31 = arith.constant 0 : index
    %c0_32 = arith.constant 0 : index
    %40 = vector.load %arg1[%c10, %c0_31, %c0_32] : memref<21x32x128xf32, #tpu.memory_space<vmem>>, vector<5x32x128xf32>
    %41 = vector.shape_cast %40 : vector<5x32x128xf32> to vector<160x128xf32>
    %cst_33 = arith.constant dense<0.000000e+00> : vector<32x128xf32>
    %42 = tpu.matmul %0, %41, %cst_33 {dimension_numbers = #tpu.dot_dimension_numbers<[1], [0], [0], [1], [0, 0, 1, 1], [], []>} : vector<32x160xf32>, vector<160x128xf32>, vector<32x128xf32> -> vector<32x128xf32>
    %43 = arith.maximumf %39, %42 : vector<32x128xf32>
    %c11 = arith.constant 11 : index
    %c0_34 = arith.constant 0 : index
    %c0_35 = arith.constant 0 : index
    %44 = vector.load %arg1[%c11, %c0_34, %c0_35] : memref<21x32x128xf32, #tpu.memory_space<vmem>>, vector<5x32x128xf32>
    %45 = vector.shape_cast %44 : vector<5x32x128xf32> to vector<160x128xf32>
    %cst_36 = arith.constant dense<0.000000e+00> : vector<32x128xf32>
    %46 = tpu.matmul %0, %45, %cst_36 {dimension_numbers = #tpu.dot_dimension_numbers<[1], [0], [0], [1], [0, 0, 1, 1], [], []>} : vector<32x160xf32>, vector<160x128xf32>, vector<32x128xf32> -> vector<32x128xf32>
    %47 = arith.maximumf %43, %46 : vector<32x128xf32>
    %c12 = arith.constant 12 : index
    %c0_37 = arith.constant 0 : index
    %c0_38 = arith.constant 0 : index
    %48 = vector.load %arg1[%c12, %c0_37, %c0_38] : memref<21x32x128xf32, #tpu.memory_space<vmem>>, vector<5x32x128xf32>
    %49 = vector.shape_cast %48 : vector<5x32x128xf32> to vector<160x128xf32>
    %cst_39 = arith.constant dense<0.000000e+00> : vector<32x128xf32>
    %50 = tpu.matmul %0, %49, %cst_39 {dimension_numbers = #tpu.dot_dimension_numbers<[1], [0], [0], [1], [0, 0, 1, 1], [], []>} : vector<32x160xf32>, vector<160x128xf32>, vector<32x128xf32> -> vector<32x128xf32>
    %51 = arith.maximumf %47, %50 : vector<32x128xf32>
    %c13 = arith.constant 13 : index
    %c0_40 = arith.constant 0 : index
    %c0_41 = arith.constant 0 : index
    %52 = vector.load %arg1[%c13, %c0_40, %c0_41] : memref<21x32x128xf32, #tpu.memory_space<vmem>>, vector<5x32x128xf32>
    %53 = vector.shape_cast %52 : vector<5x32x128xf32> to vector<160x128xf32>
    %cst_42 = arith.constant dense<0.000000e+00> : vector<32x128xf32>
    %54 = tpu.matmul %0, %53, %cst_42 {dimension_numbers = #tpu.dot_dimension_numbers<[1], [0], [0], [1], [0, 0, 1, 1], [], []>} : vector<32x160xf32>, vector<160x128xf32>, vector<32x128xf32> -> vector<32x128xf32>
    %55 = arith.maximumf %51, %54 : vector<32x128xf32>
    %c14 = arith.constant 14 : index
    %c0_43 = arith.constant 0 : index
    %c0_44 = arith.constant 0 : index
    %56 = vector.load %arg1[%c14, %c0_43, %c0_44] : memref<21x32x128xf32, #tpu.memory_space<vmem>>, vector<5x32x128xf32>
    %57 = vector.shape_cast %56 : vector<5x32x128xf32> to vector<160x128xf32>
    %cst_45 = arith.constant dense<0.000000e+00> : vector<32x128xf32>
    %58 = tpu.matmul %0, %57, %cst_45 {dimension_numbers = #tpu.dot_dimension_numbers<[1], [0], [0], [1], [0, 0, 1, 1], [], []>} : vector<32x160xf32>, vector<160x128xf32>, vector<32x128xf32> -> vector<32x128xf32>
    %59 = arith.maximumf %55, %58 : vector<32x128xf32>
    %c15 = arith.constant 15 : index
    %c0_46 = arith.constant 0 : index
    %c0_47 = arith.constant 0 : index
    %60 = vector.load %arg1[%c15, %c0_46, %c0_47] : memref<21x32x128xf32, #tpu.memory_space<vmem>>, vector<5x32x128xf32>
    %61 = vector.shape_cast %60 : vector<5x32x128xf32> to vector<160x128xf32>
    %cst_48 = arith.constant dense<0.000000e+00> : vector<32x128xf32>
    %62 = tpu.matmul %0, %61, %cst_48 {dimension_numbers = #tpu.dot_dimension_numbers<[1], [0], [0], [1], [0, 0, 1, 1], [], []>} : vector<32x160xf32>, vector<160x128xf32>, vector<32x128xf32> -> vector<32x128xf32>
    %63 = arith.maximumf %59, %62 : vector<32x128xf32>
    %c16 = arith.constant 16 : index
    %c0_49 = arith.constant 0 : index
    %c0_50 = arith.constant 0 : index
    %64 = vector.load %arg1[%c16, %c0_49, %c0_50] : memref<21x32x128xf32, #tpu.memory_space<vmem>>, vector<5x32x128xf32>
    %65 = vector.shape_cast %64 : vector<5x32x128xf32> to vector<160x128xf32>
    %cst_51 = arith.constant dense<0.000000e+00> : vector<32x128xf32>
    %66 = tpu.matmul %0, %65, %cst_51 {dimension_numbers = #tpu.dot_dimension_numbers<[1], [0], [0], [1], [0, 0, 1, 1], [], []>} : vector<32x160xf32>, vector<160x128xf32>, vector<32x128xf32> -> vector<32x128xf32>
    %67 = arith.maximumf %63, %66 : vector<32x128xf32>
    %c0_52 = arith.constant 0 : index
    %c0_53 = arith.constant 0 : index
    %68 = vector.load %arg3[%c0_52, %c0_53] : memref<32x1xf32, #tpu.memory_space<vmem>>, vector<32x1xf32>
    %69 = vector.broadcast %68 : vector<32x1xf32> to vector<32x128xf32>
    %70 = arith.addf %67, %69 : vector<32x128xf32>
    %cst_54 = arith.constant 0.000000e+00 : f32
    %71 = vector.broadcast %cst_54 : f32 to vector<32x128xf32>
    %72 = arith.maximumf %70, %71 : vector<32x128xf32>
    %c0_55 = arith.constant 0 : index
    %c0_56 = arith.constant 0 : index
    %73 = vector.load %arg4[%c0_55, %c0_56] : memref<32x128xf32, #tpu.memory_space<vmem>>, vector<32x128xf32>
    tpu.vector_store %arg4[%c0_55, %c0_56], %72 {strides = array<i32>} : memref<32x128xf32, #tpu.memory_space<vmem>>, vector<32x128xf32>,
    return
  }
  func.func @transform_0(%arg0: i32) -> (i32, i32, i32) {
    %c0_i32 = arith.constant 0 : i32
    %c0_i32_0 = arith.constant 0 : i32
    %c0_i32_1 = arith.constant 0 : i32
    return %c0_i32, %c0_i32_0, %arg0 : i32, i32, i32
  }
  func.func @transform_1(%arg0: i32) -> (i32, i32) {
    %c0_i32 = arith.constant 0 : i32
    %c0_i32_0 = arith.constant 0 : i32
    %c0_i32_1 = arith.constant 0 : i32
    return %c0_i32, %c0_i32_0 : i32, i32
  }
  func.func @transform_2(%arg0: i32) -> (i32, i32) {
    %c0_i32 = arith.constant 0 : i32
    %c0_i32_0 = arith.constant 0 : i32
    %c0_i32_1 = arith.constant 0 : i32
    return %c0_i32, %c0_i32_0 : i32, i32
  }
  func.func @transform_3(%arg0: i32) -> (i32, i32) {
    %c0_i32 = arith.constant 0 : i32
    %c0_i32_0 = arith.constant 0 : i32
    return %c0_i32, %arg0 : i32, i32
  }
}

</mosaic_0001>

<llo_original>
// kernel: tpu_custom_call.1
$region0: #{tpu_custom_call.1}
  #allocation0 [shape = 'u32[]', space=smem, size = 0x4, offset = 0x4, fixed_abs, tag = 'smem constant byte address 0x4 - core index']
  #allocation1 [shape = 'u32[144,128]{1,0:T(1,128)}', space=vmem, size = 0x12000, scoped, tag = 'internal scratch']
  %s0 = inlined_call_operand.hbm [shape: f32[21,32,256], index: 0, kind: input, shape index: {}]
  %s1 = inlined_call_operand.hbm [shape: f32[32,160], index: 1, kind: input, shape index: {}]
  %s2 = inlined_call_operand.vmem [shape: f32[32,1], index: 2, kind: input, shape index: {}]
  %s3 = inlined_call_operand.hbm [shape: f32[32,256], index: 3, kind: output, shape index: {}]
  %s4 = sld [smem:[#allocation0]]
  $region53: #{tpu_custom_call.1} parent=0
    _
  %s6 = ssub.s32 1, %s4
  %s7 = scalar_select 0, %s6, %s4
  $region1: #{tpu_custom_call.1} parent=0
    #allocation2 [shape = 'u8[688128]{0}', space=vmem, size = 0xa8000, scoped, tag = 'input window, operand 0']
    #allocation3 [shape = 's32[2]{0}', space=sflag, size = 0x8, scoped, tag = 'scoped memory for tpu_custom_call.1']
    #allocation4 [shape = 's32[2]{0}', space=sflag, size = 0x8, scoped, tag = 'scoped memory for tpu_custom_call.1']
    #allocation5 [shape = 'u8[32768]{0}', space=vmem, size = 0x8000, scoped, tag = 'input window, operand 1, single buffered']
    #allocation6 [shape = 's32[1]{0}', space=sflag, size = 0x4, scoped, tag = 'scoped memory for tpu_custom_call.1']
    #allocation7 [shape = 'u8[32768]{0}', space=vmem, size = 0x8000, scoped, tag = 'output window, operand 0']
    %8 = vsyncpa [#allocation3], 0
    %s9 = scalar_lea.sflag [#allocation3], 1
    %10 = vsyncpa %s9, 0
    %11 = vsyncpa [#allocation6], 0
    %12 = vsyncpa [#allocation4], 0
    %s13 = scalar_lea.sflag [#allocation4], 1
    %14 = vsyncpa %s13, 0
    loop: start=0, step=1, limit=4
    $region2: #{tpu_custom_call.1} parent=1 // loop_pre_header
      _
    $region3: #{tpu_custom_call.1} parent=1 // loop_header
      %s16 = sphi 0, %s20
      %p17 = scmp.ge.s32.totalorder %s16, 4
      %s26 = sphi 0, %s28
      %s29 = sphi 0, %s26
      %s30 = sphi 0, %s29
      %s46 = sphi 0, %s30
      %s50 = sphi 0, %s50
      %s52 = sphi 0, %s50
      %s53 = sphi 0, %s52
      %s67 = sphi 0, %s53
      %s71 = sphi 0, %s71
      %s73 = sphi 0, %s71
      %s74 = sphi 0, %s73
      %s88 = sphi 0, %s74
      %s94 = sphi 0, %s96
      %s97 = sphi 0, %s94
      %s98 = sphi 0, %s97
      %s114 = sphi 0, %s98
    $region4: #{tpu_custom_call.1} parent=1 // loop_header_branch
      %19 = sbr.rel (%p17) target = $region8
    $region5: #{tpu_custom_call.1} parent=1 // loop_body
      %s21 = ssub.s32 %s16, 1
      %s22 = ssub.s32 %s16, 2
      %s23 = sadd.s32 %s16, 1
      %s24 = ssub.s32 %s16, %s23
      %p25 = scmp.eq.s32.totalorder %s24, 0
      %s27 = sadd.s32 %s26, 1
      %s28 = scalar_select %p25, %s26, %s27
      %p31 = pneg %p25
      %p32 = scmp.eq.s32.totalorder %s16, 1
      %p33 = por %p31, %p32
      %p34 = scmp.ne.s32.totalorder %s26, %s29
      %p35 = scmp.eq.s32.totalorder %s16, 0
      %p36 = por %p34, %p35
      %p37 = scmp.ne.s32.totalorder %s26, %s29
      %p38 = scmp.eq.s32.totalorder %s21, 1
      %p39 = por %p37, %p38
      %p40 = scmp.ne.s32.totalorder %s29, %s30
      %p41 = scmp.eq.s32.totalorder %s21, 0
      %p42 = por %p40, %p41
      %p43 = scmp.ne.s32.totalorder %s29, %s30
      %p44 = scmp.eq.s32.totalorder %s22, 1
      %p45 = por %p43, %p44
      %p47 = scmp.ne.s32.totalorder %s30, %s46
      %p48 = scmp.eq.s32.totalorder %s22, 0
      %p49 = por %p47, %p48
      %s51 = sadd.s32 %s50, 1
      %p54 = scmp.eq.s32.totalorder %s16, 1
      %p55 = scmp.ne.s32.totalorder %s50, %s52
      %p56 = scmp.eq.s32.totalorder %s16, 0
      %p57 = por %p55, %p56
      %p58 = scmp.ne.s32.totalorder %s50, %s52
      %p59 = scmp.eq.s32.totalorder %s21, 1
      %p60 = por %p58, %p59
      %p61 = scmp.ne.s32.totalorder %s52, %s53
      %p62 = scmp.eq.s32.totalorder %s21, 0
      %p63 = por %p61, %p62
      %p64 = scmp.ne.s32.totalorder %s52, %s53
      %p65 = scmp.eq.s32.totalorder %s22, 1
      %p66 = por %p64, %p65
      %p68 = scmp.ne.s32.totalorder %s53, %s67
      %p69 = scmp.eq.s32.totalorder %s22, 0
      %p70 = por %p68, %p69
      %s72 = sadd.s32 %s71, 1
      %p75 = scmp.eq.s32.totalorder %s16, 1
      %p76 = scmp.ne.s32.totalorder %s71, %s73
      %p77 = scmp.eq.s32.totalorder %s16, 0
      %p78 = por %p76, %p77
      %p79 = scmp.ne.s32.totalorder %s71, %s73
      %p80 = scmp.eq.s32.totalorder %s21, 1
      %p81 = por %p79, %p80
      %p82 = scmp.ne.s32.totalorder %s73, %s74
      %p83 = scmp.eq.s32.totalorder %s21, 0
      %p84 = por %p82, %p83
      %p85 = scmp.ne.s32.totalorder %s73, %s74
      %p86 = scmp.eq.s32.totalorder %s22, 1
      %p87 = por %p85, %p86
      %p89 = scmp.ne.s32.totalorder %s74, %s88
      %p90 = scmp.eq.s32.totalorder %s22, 0
      %p91 = por %p89, %p90
      %s92 = ssub.s32 %s16, %s23
      %p93 = scmp.eq.s32.totalorder %s92, 0
      %s95 = sadd.s32 %s94, 1
      %s96 = scalar_select %p93, %s94, %s95
      %p99 = pneg %p93
      %p100 = scmp.eq.s32.totalorder %s16, 1
      %p101 = por %p99, %p100
      %p102 = scmp.ne.s32.totalorder %s94, %s97
      %p103 = scmp.eq.s32.totalorder %s16, 0
      %p104 = por %p102, %p103
      %p105 = scmp.ne.s32.totalorder %s94, %s97
      %p106 = scmp.eq.s32.totalorder %s21, 1
      %p107 = por %p105, %p106
      %p108 = scmp.ne.s32.totalorder %s97, %s98
      %p109 = scmp.eq.s32.totalorder %s21, 0
      %p110 = por %p108, %p109
      %p111 = scmp.ne.s32.totalorder %s97, %s98
      %p112 = scmp.eq.s32.totalorder %s22, 1
      %p113 = por %p111, %p112
      %p115 = scmp.ne.s32.totalorder %s98, %s114
      %p116 = scmp.eq.s32.totalorder %s22, 0
      %p117 = por %p115, %p116
      %p118 = scmp.le.s32.totalorder 1, %s16
      %p119 = scmp.lt.s32.totalorder %s16, 3
      %p120 = pnand %p118, %p119
      %p121 = pneg %p120
      // Predicated region
      $region9: #{tpu_custom_call.1} parent=5 // pred_check
        _
      $region10: #{tpu_custom_call.1} parent=5 // pred_check_branch
        %123 = sbr.rel (%p120) target = $region12
      $region11: #{tpu_custom_call.1} parent=5 // pred_region
        %s124 = ssub.s32 %s16, 1
        // Predicated region
        $region13: #{tpu_custom_call.1} parent=11 // pred_check
          %p125 = pneg %p63
        $region14: #{tpu_custom_call.1} parent=11 // pred_check_branch
          %127 = sbr.rel (%p125) target = $region16
        $region15: #{tpu_custom_call.1} parent=11 // pred_region
          %s129 = ssub.s32 1024, 1024
          %130 = vsyncadd [#allocation6], %s129
          %s131 = sshll.u32 [#allocation5], 4
          %s132 = int_to_ptr.vmem [resolvable:$true] %s131
          %137 = dma.hbm_to_vmem [thread:$0]  %s1, 1024, %s132, [#allocation6], 256, 256, 16
        $region16: #{tpu_custom_call.1} parent=11 // pred_fallthru
          _
        // Predicated region
        $region17: #{tpu_custom_call.1} parent=11 // pred_check
          %p138 = pneg %p84
        $region18: #{tpu_custom_call.1} parent=11 // pred_check_branch
          %140 = sbr.rel (%p138) target = $region20
        $region19: #{tpu_custom_call.1} parent=11 // pred_region
          _
        $region20: #{tpu_custom_call.1} parent=11 // pred_fallthru
          _
      $region12: #{tpu_custom_call.1} parent=5 // pred_fallthru
        _
      %p141 = scmp.lt.s32.totalorder %s16, 2
      // Predicated region
      $region21: #{tpu_custom_call.1} parent=5 // pred_check
        %p142 = pneg %p141
      $region22: #{tpu_custom_call.1} parent=5 // pred_check_branch
        %144 = sbr.rel (%p142) target = $region24
      $region23: #{tpu_custom_call.1} parent=5 // pred_region
        // Predicated region
        $region25: #{tpu_custom_call.1} parent=23 // pred_check
          %p145 = pneg %p36
        $region26: #{tpu_custom_call.1} parent=23 // pred_check_branch
          %147 = sbr.rel (%p145) target = $region28
        $region27: #{tpu_custom_call.1} parent=23 // pred_region
          %s148 = sand.u32 %s26, 1
          %s149 = scalar_lea.sflag [#allocation3], %s148
          %s150 = sand.u32 %s26, 1
          %s151 = smul.addr %s150, 672
          %s152 = scalar_lea.vmem [#allocation2], %s151
          %s154 = ssub.s32 10752, 10752
          %155 = vsyncadd %s149, %s154
          %s156 = smul.addr %s16, 128
          %s157 = scalar_lea.hbm %s0, %s156
          %s158 = sshll.u32 %s152, 4
          %s159 = int_to_ptr.vmem [resolvable:$true] %s158
          %164 = dma.hbm_to_vmem [thread:$0]  %s157, 10752, %s159, %s149, 256, 128, 8
        $region28: #{tpu_custom_call.1} parent=23 // pred_fallthru
          _
      $region24: #{tpu_custom_call.1} parent=5 // pred_fallthru
        _
      %p165 = scmp.le.s32.totalorder 1, %s16
      %p166 = scmp.lt.s32.totalorder %s16, 3
      %p167 = pnand %p165, %p166
      %p168 = pneg %p167
      // Predicated region
      $region29: #{tpu_custom_call.1} parent=5 // pred_check
        _
      $region30: #{tpu_custom_call.1} parent=5 // pred_check_branch
        %170 = sbr.rel (%p167) target = $region32
      $region31: #{tpu_custom_call.1} parent=5 // pred_region
        %s171 = ssub.s32 %s16, 1
        %s172 = sand.u32 %s29, 1
        %s173 = scalar_lea.sflag [#allocation3], %s172
        %s174 = sand.u32 %s29, 1
        %s175 = smul.addr %s174, 672
        %s176 = scalar_lea.vmem [#allocation2], %s175
        // Predicated region
        $region33: #{tpu_custom_call.1} parent=31 // pred_check
          %p177 = pneg %p42
        $region34: #{tpu_custom_call.1} parent=31 // pred_check_branch
          %179 = sbr.rel (%p177) target = $region36
        $region35: #{tpu_custom_call.1} parent=31 // pred_region
          %180 = dma.done %s173, 10752
        $region36: #{tpu_custom_call.1} parent=31 // pred_fallthru
          _
        // Predicated region
        $region37: #{tpu_custom_call.1} parent=31 // pred_check
          %p181 = pneg %p63
        $region38: #{tpu_custom_call.1} parent=31 // pred_check_branch
          %183 = sbr.rel (%p181) target = $region40
        $region39: #{tpu_custom_call.1} parent=31 // pred_region
          %184 = dma.done [#allocation6], 1024
        $region40: #{tpu_custom_call.1} parent=31 // pred_fallthru
          _
        %s185 = sand.u32 %s29, 1
        %s186 = scalar_lea.sflag [#allocation3], %s185
        %s187 = sand.u32 %s29, 1
        %s188 = smul.addr %s187, 672
        %s189 = scalar_lea.vmem [#allocation2], %s188
        %p190 = pneg %p42
        %p191 = pneg %p39
        %p192 = pneg %p63
        %p193 = pneg %p60
        %p194 = pneg %p84
        %p195 = pneg %p81
        %p196 = pneg %p110
        %p197 = pneg %p107
        %s198 = sand.u32 %s97, 1
        %s199 = scalar_lea.sflag [#allocation4], %s198
        %s200 = sand.u32 %s97, 1
        %s201 = smul.addr %s200, 32
        %s202 = scalar_lea.vmem [#allocation7], %s201
        %v203 = vld [vmem:[#allocation5] sm:$0xff]
        %v204 = vld [vmem:[#allocation5 + $0x8] sm:$0xff]
        %v205 = vld [vmem:[#allocation5 + $0x10] sm:$0xff]
        %v206 = vld [vmem:[#allocation5 + $0x18] sm:$0xff]
        %v207 = vld [vmem:[#allocation5 + $0x20] sm:$0xff]
        %v208 = vld [vmem:[#allocation5 + $0x28] sm:$0xff]
        %v209 = vld [vmem:[#allocation5 + $0x30] sm:$0xff]
        %v210 = vld [vmem:[#allocation5 + $0x38] sm:$0xff]
        %v211 = vld [vmem:[%s176] sm:$0xff]
        %v212 = vld [vmem:[%s176 + $0x8] sm:$0xff]
        %v213 = vld [vmem:[%s176 + $0x10] sm:$0xff]
        %v214 = vld [vmem:[%s176 + $0x18] sm:$0xff]
        %v215 = vld [vmem:[%s176 + $0x20] sm:$0xff]
        %v216 = vld [vmem:[%s176 + $0x28] sm:$0xff]
        %v217 = vld [vmem:[%s176 + $0x30] sm:$0xff]
        %v218 = vld [vmem:[%s176 + $0x38] sm:$0xff]
        %v219 = vld [vmem:[%s176 + $0x40] sm:$0xff]
        %v220 = vld [vmem:[%s176 + $0x48] sm:$0xff]
        %v221 = vld [vmem:[%s176 + $0x50] sm:$0xff]
        %v222 = vld [vmem:[%s176 + $0x58] sm:$0xff]
        %v223 = vld [vmem:[%s176 + $0x60] sm:$0xff]
        %v224 = vld [vmem:[%s176 + $0x68] sm:$0xff]
        %v225 = vld [vmem:[%s176 + $0x70] sm:$0xff]
        %v226 = vld [vmem:[%s176 + $0x78] sm:$0xff]
        %v227 = vld [vmem:[%s176 + $0x80] sm:$0xff]
        %v228 = vld [vmem:[%s176 + $0x88] sm:$0xff]
        %v229 = vld [vmem:[%s176 + $0x90] sm:$0xff]
        %v230 = vld [vmem:[%s176 + $0x98] sm:$0xff]
        %vm231 = vcmask 261120
        %v233 = vsel %vm231, %v204, 0
        %v236 = vsel %vm231, %v206, 0
        %v239 = vsel %vm231, %v208, 0
        %v242 = vsel %vm231, %v210, 0
        %244 = vmatprep.subr.mxu0 0.0
        %245 = vmatpush1.msra.mxu0 %v211
        %246 = vmatprep.subr.mxu0 0.0
        %247 = vmatpush1.msra.mxu0 %v212
        %248 = vmatprep.subr.mxu0 0.0
        %249 = vmatpush1.msra.mxu0 %v213
        %250 = vmatprep.subr.mxu0 0.0
        %251 = vmatpush1.msra.mxu0 %v214
        %252 = vmatprep.subr.mxu0 0.0
        %253 = vmatpush1.msra.mxu0 %v215
        %254 = vmatprep.subr.mxu0 0.0
        %255 = vmatpush1.msra.mxu0 %v216
        %256 = vmatprep.subr.mxu0 0.0
        %257 = vmatpush1.msra.mxu0 %v217
        %258 = vmatprep.subr.mxu0 0.0
        %259 = vmatpush1.msra.mxu0 %v218
        %260 = vmatprep.subr.mxu0 0.0
        %261 = vmatpush1.msra.mxu0 %v219
        %262 = vmatprep.subr.mxu0 0.0
        %263 = vmatpush1.msra.mxu0 %v220
        %264 = vmatprep.subr.mxu0 0.0
        %265 = vmatpush1.msra.mxu0 %v221
        %266 = vmatprep.subr.mxu0 0.0
        %267 = vmatpush1.msra.mxu0 %v222
        %268 = vmatprep.subr.mxu0 0.0
        %269 = vmatpush1.msra.mxu0 %v223
        %270 = vmatprep.subr.mxu0 0.0
        %271 = vmatpush1.msra.mxu0 %v224
        %272 = vmatprep.subr.mxu0 0.0
        %273 = vmatpush1.msra.mxu0 %v225
        %274 = vmatprep.subr.mxu0 0.0
        %275 = vmatpush1.msra.mxu0 %v226
        %276 = vmatprep.subr.mxu0 0.0
        %277 = vmatpush1.msra.mxu0 %v227
        %278 = vmatprep.subr.mxu0 0.0
        %279 = vmatpush1.msra.mxu0 %v228
        %280 = vmatprep.subr.mxu0 0.0
        %281 = vmatpush1.msra.mxu0 %v229
        %282 = vmatprep.subr.mxu0 0.0
        %283 = vmatpush1.msra.mxu0 %v230
        %284 = vmatprep.subr.mxu0 0.0
        %285 = vmatpush1.msra.mxu0 0.0
        %286 = vmatprep.subr.mxu0 0.0
        %287 = vmatpush1.msra.mxu0 0.0
        %288 = vmatprep.subr.mxu0 0.0
        %289 = vmatpush1.msra.mxu0 0.0
        %290 = vmatprep.subr.mxu0 0.0
        %291 = vmatpush1.msra.mxu0 0.0
        %292 = vmatprep.subr.mxu0 0.0
        %293 = vmatpush1.msra.mxu0 0.0
        %294 = vmatprep.subr.mxu0 0.0
        %295 = vmatpush1.msra.mxu0 0.0
        %296 = vmatprep.subr.mxu0 0.0
        %297 = vmatpush1.msra.mxu0 0.0
        %298 = vmatprep.subr.mxu0 0.0
        %299 = vmatpush1.msra.mxu0 0.0
        %300 = vmatprep.subr.mxu0 0.0
        %301 = vmatpush1.msra.mxu0 0.0
        %302 = vmatprep.subr.mxu0 0.0
        %303 = vmatpush1.msra.mxu0 0.0
        %304 = vmatprep.subr.mxu0 0.0
        %305 = vmatpush1.msra.mxu0 0.0
        %306 = vmatprep.subr.mxu0 0.0
        %307 = vmatpush1.msra.mxu0 0.0
        %308 = vmatprep.mubr.f32.mxu0 %v233
        %309 = vmatmul.mubr.f32.gmra.mrb[0].mxu0 %v203
        %v310 = vpop.f32.mrb[0].mxu0
        %v311 = vadd.f32 0.0, %v310
        %v312 = vpop.f32.mrb[0].mxu0
        %313 = vmatprep.mubr.f32.mxu0 %v236
        %314 = vmatmul.mubr.f32.gmra.mrb[0].mxu0 %v205
        %v315 = vpop.f32.mrb[0].mxu0
        %v316 = vadd.f32 0.0, %v315
        %v317 = vpop.f32.mrb[0].mxu0
        %318 = vmatprep.mubr.f32.mxu0 %v239
        %319 = vmatmul.mubr.f32.gmra.mrb[0].mxu0 %v207
        %v320 = vpop.f32.mrb[0].mxu0
        %v321 = vadd.f32 0.0, %v320
        %v322 = vpop.f32.mrb[0].mxu0
        %323 = vmatprep.mubr.f32.mxu0 %v242
        %324 = vmatmul.mubr.f32.gmra.mrb[0].mxu0 %v209
        %v325 = vpop.f32.mrb[0].mxu0
        %v326 = vadd.f32 0.0, %v325
        %v327 = vpop.f32.mrb[0].mxu0
        %328 = vdwg.mxu0
        %s329 = scalar_lea.vmem %s176, 32 [#allocation2]
        %v330 = vld [vmem:[%s329] sm:$0xff]
        %v331 = vld [vmem:[%s329 + $0x8] sm:$0xff]
        %v332 = vld [vmem:[%s329 + $0x10] sm:$0xff]
        %v333 = vld [vmem:[%s329 + $0x18] sm:$0xff]
        %v334 = vld [vmem:[%s329 + $0x20] sm:$0xff]
        %v335 = vld [vmem:[%s329 + $0x28] sm:$0xff]
        %v336 = vld [vmem:[%s329 + $0x30] sm:$0xff]
        %v337 = vld [vmem:[%s329 + $0x38] sm:$0xff]
        %v338 = vld [vmem:[%s329 + $0x40] sm:$0xff]
        %v339 = vld [vmem:[%s329 + $0x48] sm:$0xff]
        %v340 = vld [vmem:[%s329 + $0x50] sm:$0xff]
        %v341 = vld [vmem:[%s329 + $0x58] sm:$0xff]
        %v342 = vld [vmem:[%s329 + $0x60] sm:$0xff]
        %v343 = vld [vmem:[%s329 + $0x68] sm:$0xff]
        %v344 = vld [vmem:[%s329 + $0x70] sm:$0xff]
        %v345 = vld [vmem:[%s329 + $0x78] sm:$0xff]
        %v346 = vld [vmem:[%s329 + $0x80] sm:$0xff]
        %v347 = vld [vmem:[%s329 + $0x88] sm:$0xff]
        %v348 = vld [vmem:[%s329 + $0x90] sm:$0xff]
        %v349 = vld [vmem:[%s329 + $0x98] sm:$0xff]
        %350 = vmatprep.subr.mxu0 0.0
        %351 = vmatpush1.msra.mxu0 %v330
        %352 = vmatprep.subr.mxu0 0.0
        %353 = vmatpush1.msra.mxu0 %v331
        %354 = vmatprep.subr.mxu0 0.0
        %355 = vmatpush1.msra.mxu0 %v332
        %356 = vmatprep.subr.mxu0 0.0
        %357 = vmatpush1.msra.mxu0 %v333
        %358 = vmatprep.subr.mxu0 0.0
        %359 = vmatpush1.msra.mxu0 %v334
        %360 = vmatprep.subr.mxu0 0.0
        %361 = vmatpush1.msra.mxu0 %v335
        %362 = vmatprep.subr.mxu0 0.0
        %363 = vmatpush1.msra.mxu0 %v336
        %364 = vmatprep.subr.mxu0 0.0
        %365 = vmatpush1.msra.mxu0 %v337
        %366 = vmatprep.subr.mxu0 0.0
        %367 = vmatpush1.msra.mxu0 %v338
        %368 = vmatprep.subr.mxu0 0.0
        %369 = vmatpush1.msra.mxu0 %v339
        %370 = vmatprep.subr.mxu0 0.0
        %371 = vmatpush1.msra.mxu0 %v340
        %372 = vmatprep.subr.mxu0 0.0
        %373 = vmatpush1.msra.mxu0 %v341
        %374 = vmatprep.subr.mxu0 0.0
        %375 = vmatpush1.msra.mxu0 %v342
        %376 = vmatprep.subr.mxu0 0.0
        %377 = vmatpush1.msra.mxu0 %v343
        %378 = vmatprep.subr.mxu0 0.0
        %379 = vmatpush1.msra.mxu0 %v344
        %380 = vmatprep.subr.mxu0 0.0
        %381 = vmatpush1.msra.mxu0 %v345
        %382 = vmatprep.subr.mxu0 0.0
        %383 = vmatpush1.msra.mxu0 %v346
        %384 = vmatprep.subr.mxu0 0.0
        %385 = vmatpush1.msra.mxu0 %v347
        %386 = vmatprep.subr.mxu0 0.0
        %387 = vmatpush1.msra.mxu0 %v348
        %388 = vmatprep.subr.mxu0 0.0
        %389 = vmatpush1.msra.mxu0 %v349
        %390 = vmatprep.subr.mxu0 0.0
        %391 = vmatpush1.msra.mxu0 0.0
        %392 = vmatprep.subr.mxu0 0.0
        %393 = vmatpush1.msra.mxu0 0.0
        %394 = vmatprep.subr.mxu0 0.0
        %395 = vmatpush1.msra.mxu0 0.0
        %396 = vmatprep.subr.mxu0 0.0
        %397 = vmatpush1.msra.mxu0 0.0
        %398 = vmatprep.subr.mxu0 0.0
        %399 = vmatpush1.msra.mxu0 0.0
        %400 = vmatprep.subr.mxu0 0.0
        %401 = vmatpush1.msra.mxu0 0.0
        %402 = vmatprep.subr.mxu0 0.0
        %403 = vmatpush1.msra.mxu0 0.0
        %404 = vmatprep.subr.mxu0 0.0
        %405 = vmatpush1.msra.mxu0 0.0
        %406 = vmatprep.subr.mxu0 0.0
        %407 = vmatpush1.msra.mxu0 0.0
        %408 = vmatprep.subr.mxu0 0.0
        %409 = vmatpush1.msra.mxu0 0.0
        %410 = vmatprep.subr.mxu0 0.0
        %411 = vmatpush1.msra.mxu0 0.0
        %412 = vmatprep.subr.mxu0 0.0
        %413 = vmatpush1.msra.mxu0 0.0
        %414 = vmatprep.mubr.f32.mxu0 %v233
        %415 = vmatmul.mubr.f32.gmra.mrb[0].mxu0 %v203
        %v416 = vpop.f32.mrb[0].mxu0
        %v417 = vadd.f32 0.0, %v416
        %v418 = vpop.f32.mrb[0].mxu0
        %419 = vmatprep.mubr.f32.mxu0 %v236
        %420 = vmatmul.mubr.f32.gmra.mrb[0].mxu0 %v205
        %v421 = vpop.f32.mrb[0].mxu0
        %v422 = vadd.f32 0.0, %v421
        %v423 = vpop.f32.mrb[0].mxu0
        %424 = vmatprep.mubr.f32.mxu0 %v239
        %425 = vmatmul.mubr.f32.gmra.mrb[0].mxu0 %v207
        %v426 = vpop.f32.mrb[0].mxu0
        %v427 = vadd.f32 0.0, %v426
        %v428 = vpop.f32.mrb[0].mxu0
        %429 = vmatprep.mubr.f32.mxu0 %v242
        %430 = vmatmul.mubr.f32.gmra.mrb[0].mxu0 %v209
        %v431 = vpop.f32.mrb[0].mxu0
        %v432 = vadd.f32 0.0, %v431
        %v433 = vpop.f32.mrb[0].mxu0
        %434 = vdwg.mxu0
        %v435 = vmax.f32 %v311, %v417
        %v436 = vmax.f32 %v316, %v422
        %v437 = vmax.f32 %v321, %v427
        %v438 = vmax.f32 %v326, %v432
        %s439 = scalar_lea.vmem %s176, 64 [#allocation2]
        %v440 = vld [vmem:[%s439] sm:$0xff]
        %v441 = vld [vmem:[%s439 + $0x8] sm:$0xff]
        %v442 = vld [vmem:[%s439 + $0x10] sm:$0xff]
        %v443 = vld [vmem:[%s439 + $0x18] sm:$0xff]
        %v444 = vld [vmem:[%s439 + $0x20] sm:$0xff]
        %v445 = vld [vmem:[%s439 + $0x28] sm:$0xff]
        %v446 = vld [vmem:[%s439 + $0x30] sm:$0xff]
        %v447 = vld [vmem:[%s439 + $0x38] sm:$0xff]
        %v448 = vld [vmem:[%s439 + $0x40] sm:$0xff]
        %v449 = vld [vmem:[%s439 + $0x48] sm:$0xff]
        %v450 = vld [vmem:[%s439 + $0x50] sm:$0xff]
        %v451 = vld [vmem:[%s439 + $0x58] sm:$0xff]
        %v452 = vld [vmem:[%s439 + $0x60] sm:$0xff]
        %v453 = vld [vmem:[%s439 + $0x68] sm:$0xff]
        %v454 = vld [vmem:[%s439 + $0x70] sm:$0xff]
        %v455 = vld [vmem:[%s439 + $0x78] sm:$0xff]
        %v456 = vld [vmem:[%s439 + $0x80] sm:$0xff]
        %v457 = vld [vmem:[%s439 + $0x88] sm:$0xff]
        %v458 = vld [vmem:[%s439 + $0x90] sm:$0xff]
        %v459 = vld [vmem:[%s439 + $0x98] sm:$0xff]
        %460 = vmatprep.subr.mxu0 0.0
        %461 = vmatpush1.msra.mxu0 %v440
        %462 = vmatprep.subr.mxu0 0.0
        %463 = vmatpush1.msra.mxu0 %v441
        %464 = vmatprep.subr.mxu0 0.0
        %465 = vmatpush1.msra.mxu0 %v442
        %466 = vmatprep.subr.mxu0 0.0
        %467 = vmatpush1.msra.mxu0 %v443
        %468 = vmatprep.subr.mxu0 0.0
        %469 = vmatpush1.msra.mxu0 %v444
        %470 = vmatprep.subr.mxu0 0.0
        %471 = vmatpush1.msra.mxu0 %v445
        %472 = vmatprep.subr.mxu0 0.0
        %473 = vmatpush1.msra.mxu0 %v446
        %474 = vmatprep.subr.mxu0 0.0
        %475 = vmatpush1.msra.mxu0 %v447
        %476 = vmatprep.subr.mxu0 0.0
        %477 = vmatpush1.msra.mxu0 %v448
        %478 = vmatprep.subr.mxu0 0.0
        %479 = vmatpush1.msra.mxu0 %v449
        %480 = vmatprep.subr.mxu0 0.0
        %481 = vmatpush1.msra.mxu0 %v450
        %482 = vmatprep.subr.mxu0 0.0
        %483 = vmatpush1.msra.mxu0 %v451
        %484 = vmatprep.subr.mxu0 0.0
        %485 = vmatpush1.msra.mxu0 %v452
        %486 = vmatprep.subr.mxu0 0.0
        %487 = vmatpush1.msra.mxu0 %v453
        %488 = vmatprep.subr.mxu0 0.0
        %489 = vmatpush1.msra.mxu0 %v454
        %490 = vmatprep.subr.mxu0 0.0
        %491 = vmatpush1.msra.mxu0 %v455
        %492 = vmatprep.subr.mxu0 0.0
        %493 = vmatpush1.msra.mxu0 %v456
        %494 = vmatprep.subr.mxu0 0.0
        %495 = vmatpush1.msra.mxu0 %v457
        %496 = vmatprep.subr.mxu0 0.0
        %497 = vmatpush1.msra.mxu0 %v458
        %498 = vmatprep.subr.mxu0 0.0
        %499 = vmatpush1.msra.mxu0 %v459
        %500 = vmatprep.subr.mxu0 0.0
        %501 = vmatpush1.msra.mxu0 0.0
        %502 = vmatprep.subr.mxu0 0.0
        %503 = vmatpush1.msra.mxu0 0.0
        %504 = vmatprep.subr.mxu0 0.0
        %505 = vmatpush1.msra.mxu0 0.0
        %506 = vmatprep.subr.mxu0 0.0
        %507 = vmatpush1.msra.mxu0 0.0
        %508 = vmatprep.subr.mxu0 0.0
        %509 = vmatpush1.msra.mxu0 0.0
        %510 = vmatprep.subr.mxu0 0.0
        %511 = vmatpush1.msra.mxu0 0.0
        %512 = vmatprep.subr.mxu0 0.0
        %513 = vmatpush1.msra.mxu0 0.0
        %514 = vmatprep.subr.mxu0 0.0
        %515 = vmatpush1.msra.mxu0 0.0
        %516 = vmatprep.subr.mxu0 0.0
        %517 = vmatpush1.msra.mxu0 0.0
        %518 = vmatprep.subr.mxu0 0.0
        %519 = vmatpush1.msra.mxu0 0.0
        %520 = vmatprep.subr.mxu0 0.0
        %521 = vmatpush1.msra.mxu0 0.0
        %522 = vmatprep.subr.mxu0 0.0
        %523 = vmatpush1.msra.mxu0 0.0
        %524 = vmatprep.mubr.f32.mxu0 %v233
        %525 = vmatmul.mubr.f32.gmra.mrb[0].mxu0 %v203
        %v526 = vpop.f32.mrb[0].mxu0
        %v527 = vadd.f32 0.0, %v526
        %v528 = vpop.f32.mrb[0].mxu0
        %529 = vmatprep.mubr.f32.mxu0 %v236
        %530 = vmatmul.mubr.f32.gmra.mrb[0].mxu0 %v205
        %v531 = vpop.f32.mrb[0].mxu0
        %v532 = vadd.f32 0.0, %v531
        %v533 = vpop.f32.mrb[0].mxu0
        %534 = vmatprep.mubr.f32.mxu0 %v239
        %535 = vmatmul.mubr.f32.gmra.mrb[0].mxu0 %v207
        %v536 = vpop.f32.mrb[0].mxu0
        %v537 = vadd.f32 0.0, %v536
        %v538 = vpop.f32.mrb[0].mxu0
        %539 = vmatprep.mubr.f32.mxu0 %v242
        %540 = vmatmul.mubr.f32.gmra.mrb[0].mxu0 %v209
        %v541 = vpop.f32.mrb[0].mxu0
        %v542 = vadd.f32 0.0, %v541
        %v543 = vpop.f32.mrb[0].mxu0
        %544 = vdwg.mxu0
        %v545 = vmax.f32 %v435, %v527
        %v546 = vmax.f32 %v436, %v532
        %v547 = vmax.f32 %v437, %v537
        %v548 = vmax.f32 %v438, %v542
        %s549 = scalar_lea.vmem %s176, 96 [#allocation2]
        %v550 = vld [vmem:[%s549] sm:$0xff]
        %v551 = vld [vmem:[%s549 + $0x8] sm:$0xff]
        %v552 = vld [vmem:[%s549 + $0x10] sm:$0xff]
        %v553 = vld [vmem:[%s549 + $0x18] sm:$0xff]
        %v554 = vld [vmem:[%s549 + $0x20] sm:$0xff]
        %v555 = vld [vmem:[%s549 + $0x28] sm:$0xff]
        %v556 = vld [vmem:[%s549 + $0x30] sm:$0xff]
        %v557 = vld [vmem:[%s549 + $0x38] sm:$0xff]
        %v558 = vld [vmem:[%s549 + $0x40] sm:$0xff]
        %v559 = vld [vmem:[%s549 + $0x48] sm:$0xff]
        %v560 = vld [vmem:[%s549 + $0x50] sm:$0xff]
        %v561 = vld [vmem:[%s549 + $0x58] sm:$0xff]
        %v562 = vld [vmem:[%s549 + $0x60] sm:$0xff]
        %v563 = vld [vmem:[%s549 + $0x68] sm:$0xff]
        %v564 = vld [vmem:[%s549 + $0x70] sm:$0xff]
        %v565 = vld [vmem:[%s549 + $0x78] sm:$0xff]
        %v566 = vld [vmem:[%s549 + $0x80] sm:$0xff]
        %v567 = vld [vmem:[%s549 + $0x88] sm:$0xff]
        %v568 = vld [vmem:[%s549 + $0x90] sm:$0xff]
        %v569 = vld [vmem:[%s549 + $0x98] sm:$0xff]
        %570 = vmatprep.subr.mxu0 0.0
        %571 = vmatpush1.msra.mxu0 %v550
        %572 = vmatprep.subr.mxu0 0.0
        %573 = vmatpush1.msra.mxu0 %v551
        %574 = vmatprep.subr.mxu0 0.0
        %575 = vmatpush1.msra.mxu0 %v552
        %576 = vmatprep.subr.mxu0 0.0
        %577 = vmatpush1.msra.mxu0 %v553
        %578 = vmatprep.subr.mxu0 0.0
        %579 = vmatpush1.msra.mxu0 %v554
        %580 = vmatprep.subr.mxu0 0.0
        %581 = vmatpush1.msra.mxu0 %v555
        %582 = vmatprep.subr.mxu0 0.0
        %583 = vmatpush1.msra.mxu0 %v556
        %584 = vmatprep.subr.mxu0 0.0
        %585 = vmatpush1.msra.mxu0 %v557
        %586 = vmatprep.subr.mxu0 0.0
        %587 = vmatpush1.msra.mxu0 %v558
        %588 = vmatprep.subr.mxu0 0.0
        %589 = vmatpush1.msra.mxu0 %v559
        %590 = vmatprep.subr.mxu0 0.0
        %591 = vmatpush1.msra.mxu0 %v560
        %592 = vmatprep.subr.mxu0 0.0
        %593 = vmatpush1.msra.mxu0 %v561
        %594 = vmatprep.subr.mxu0 0.0
        %595 = vmatpush1.msra.mxu0 %v562
        %596 = vmatprep.subr.mxu0 0.0
        %597 = vmatpush1.msra.mxu0 %v563
        %598 = vmatprep.subr.mxu0 0.0
        %599 = vmatpush1.msra.mxu0 %v564
        %600 = vmatprep.subr.mxu0 0.0
        %601 = vmatpush1.msra.mxu0 %v565
        %602 = vmatprep.subr.mxu0 0.0
        %603 = vmatpush1.msra.mxu0 %v566
        %604 = vmatprep.subr.mxu0 0.0
        %605 = vmatpush1.msra.mxu0 %v567
        %606 = vmatprep.subr.mxu0 0.0
        %607 = vmatpush1.msra.mxu0 %v568
        %608 = vmatprep.subr.mxu0 0.0
        %609 = vmatpush1.msra.mxu0 %v569
        %610 = vmatprep.subr.mxu0 0.0
        %611 = vmatpush1.msra.mxu0 0.0
        %612 = vmatprep.subr.mxu0 0.0
        %613 = vmatpush1.msra.mxu0 0.0
        %614 = vmatprep.subr.mxu0 0.0
        %615 = vmatpush1.msra.mxu0 0.0
        %616 = vmatprep.subr.mxu0 0.0
        %617 = vmatpush1.msra.mxu0 0.0
        %618 = vmatprep.subr.mxu0 0.0
        %619 = vmatpush1.msra.mxu0 0.0
        %620 = vmatprep.subr.mxu0 0.0
        %621 = vmatpush1.msra.mxu0 0.0
        %622 = vmatprep.subr.mxu0 0.0
        %623 = vmatpush1.msra.mxu0 0.0
        %624 = vmatprep.subr.mxu0 0.0
        %625 = vmatpush1.msra.mxu0 0.0
        %626 = vmatprep.subr.mxu0 0.0
        %627 = vmatpush1.msra.mxu0 0.0
        %628 = vmatprep.subr.mxu0 0.0
        %629 = vmatpush1.msra.mxu0 0.0
        %630 = vmatprep.subr.mxu0 0.0
        %631 = vmatpush1.msra.mxu0 0.0
        %632 = vmatprep.subr.mxu0 0.0
        %633 = vmatpush1.msra.mxu0 0.0
        %634 = vmatprep.mubr.f32.mxu0 %v233
        %635 = vmatmul.mubr.f32.gmra.mrb[0].mxu0 %v203
        %v636 = vpop.f32.mrb[0].mxu0
        %v637 = vadd.f32 0.0, %v636
        %v638 = vpop.f32.mrb[0].mxu0
        %639 = vmatprep.mubr.f32.mxu0 %v236
        %640 = vmatmul.mubr.f32.gmra.mrb[0].mxu0 %v205
        %v641 = vpop.f32.mrb[0].mxu0
        %v642 = vadd.f32 0.0, %v641
        %v643 = vpop.f32.mrb[0].mxu0
        %644 = vmatprep.mubr.f32.mxu0 %v239
        %645 = vmatmul.mubr.f32.gmra.mrb[0].mxu0 %v207
        %v646 = vpop.f32.mrb[0].mxu0
        %v647 = vadd.f32 0.0, %v646
        %v648 = vpop.f32.mrb[0].mxu0
        %649 = vmatprep.mubr.f32.mxu0 %v242
        %650 = vmatmul.mubr.f32.gmra.mrb[0].mxu0 %v209
        %v651 = vpop.f32.mrb[0].mxu0
        %v652 = vadd.f32 0.0, %v651
        %v653 = vpop.f32.mrb[0].mxu0
        %654 = vdwg.mxu0
        %v655 = vmax.f32 %v545, %v637
        %v656 = vmax.f32 %v546, %v642
        %v657 = vmax.f32 %v547, %v647
        %v658 = vmax.f32 %v548, %v652
        %s659 = scalar_lea.vmem %s176, 128 [#allocation2]
        %v660 = vld [vmem:[%s659] sm:$0xff]
        %v661 = vld [vmem:[%s659 + $0x8] sm:$0xff]
        %v662 = vld [vmem:[%s659 + $0x10] sm:$0xff]
        %v663 = vld [vmem:[%s659 + $0x18] sm:$0xff]
        %v664 = vld [vmem:[%s659 + $0x20] sm:$0xff]
        %v665 = vld [vmem:[%s659 + $0x28] sm:$0xff]
        %v666 = vld [vmem:[%s659 + $0x30] sm:$0xff]
        %v667 = vld [vmem:[%s659 + $0x38] sm:$0xff]
        %v668 = vld [vmem:[%s659 + $0x40] sm:$0xff]
        %v669 = vld [vmem:[%s659 + $0x48] sm:$0xff]
        %v670 = vld [vmem:[%s659 + $0x50] sm:$0xff]
        %v671 = vld [vmem:[%s659 + $0x58] sm:$0xff]
        %v672 = vld [vmem:[%s659 + $0x60] sm:$0xff]
        %v673 = vld [vmem:[%s659 + $0x68] sm:$0xff]
        %v674 = vld [vmem:[%s659 + $0x70] sm:$0xff]
        %v675 = vld [vmem:[%s659 + $0x78] sm:$0xff]
        %v676 = vld [vmem:[%s659 + $0x80] sm:$0xff]
        %v677 = vld [vmem:[%s659 + $0x88] sm:$0xff]
        %v678 = vld [vmem:[%s659 + $0x90] sm:$0xff]
        %v679 = vld [vmem:[%s659 + $0x98] sm:$0xff]
        %680 = vmatprep.subr.mxu0 0.0
        %681 = vmatpush1.msra.mxu0 %v660
        %682 = vmatprep.subr.mxu0 0.0
        %683 = vmatpush1.msra.mxu0 %v661
        %684 = vmatprep.subr.mxu0 0.0
        %685 = vmatpush1.msra.mxu0 %v662
        %686 = vmatprep.subr.mxu0 0.0
        %687 = vmatpush1.msra.mxu0 %v663
        %688 = vmatprep.subr.mxu0 0.0
        %689 = vmatpush1.msra.mxu0 %v664
        %690 = vmatprep.subr.mxu0 0.0
        %691 = vmatpush1.msra.mxu0 %v665
        %692 = vmatprep.subr.mxu0 0.0
        %693 = vmatpush1.msra.mxu0 %v666
        %694 = vmatprep.subr.mxu0 0.0
        %695 = vmatpush1.msra.mxu0 %v667
        %696 = vmatprep.subr.mxu0 0.0
        %697 = vmatpush1.msra.mxu0 %v668
        %698 = vmatprep.subr.mxu0 0.0
        %699 = vmatpush1.msra.mxu0 %v669
        %700 = vmatprep.subr.mxu0 0.0
        %701 = vmatpush1.msra.mxu0 %v670
        %702 = vmatprep.subr.mxu0 0.0
        %703 = vmatpush1.msra.mxu0 %v671
        %704 = vmatprep.subr.mxu0 0.0
        %705 = vmatpush1.msra.mxu0 %v672
        %706 = vmatprep.subr.mxu0 0.0
        %707 = vmatpush1.msra.mxu0 %v673
        %708 = vmatprep.subr.mxu0 0.0
        %709 = vmatpush1.msra.mxu0 %v674
        %710 = vmatprep.subr.mxu0 0.0
        %711 = vmatpush1.msra.mxu0 %v675
        %712 = vmatprep.subr.mxu0 0.0
        %713 = vmatpush1.msra.mxu0 %v676
        %714 = vmatprep.subr.mxu0 0.0
        %715 = vmatpush1.msra.mxu0 %v677
        %716 = vmatprep.subr.mxu0 0.0
        %717 = vmatpush1.msra.mxu0 %v678
        %718 = vmatprep.subr.mxu0 0.0
        %719 = vmatpush1.msra.mxu0 %v679
        %720 = vmatprep.subr.mxu0 0.0
        %721 = vmatpush1.msra.mxu0 0.0
        %722 = vmatprep.subr.mxu0 0.0
        %723 = vmatpush1.msra.mxu0 0.0
        %724 = vmatprep.subr.mxu0 0.0
        %725 = vmatpush1.msra.mxu0 0.0
        %726 = vmatprep.subr.mxu0 0.0
        %727 = vmatpush1.msra.mxu0 0.0
        %728 = vmatprep.subr.mxu0 0.0
        %729 = vmatpush1.msra.mxu0 0.0
        %730 = vmatprep.subr.mxu0 0.0
        %731 = vmatpush1.msra.mxu0 0.0
        %732 = vmatprep.subr.mxu0 0.0
        %733 = vmatpush1.msra.mxu0 0.0
        %734 = vmatprep.subr.mxu0 0.0
        %735 = vmatpush1.msra.mxu0 0.0
        %736 = vmatprep.subr.mxu0 0.0
        %737 = vmatpush1.msra.mxu0 0.0
        %738 = vmatprep.subr.mxu0 0.0
        %739 = vmatpush1.msra.mxu0 0.0
        %740 = vmatprep.subr.mxu0 0.0
        %741 = vmatpush1.msra.mxu0 0.0
        %742 = vmatprep.subr.mxu0 0.0
        %743 = vmatpush1.msra.mxu0 0.0
        %744 = vmatprep.mubr.f32.mxu0 %v233
        %745 = vmatmul.mubr.f32.gmra.mrb[0].mxu0 %v203
        %v746 = vpop.f32.mrb[0].mxu0
        %v747 = vadd.f32 0.0, %v746
        %v748 = vpop.f32.mrb[0].mxu0
        %749 = vmatprep.mubr.f32.mxu0 %v236
        %750 = vmatmul.mubr.f32.gmra.mrb[0].mxu0 %v205
        %v751 = vpop.f32.mrb[0].mxu0
        %v752 = vadd.f32 0.0, %v751
        %v753 = vpop.f32.mrb[0].mxu0
        %754 = vmatprep.mubr.f32.mxu0 %v239
        %755 = vmatmul.mubr.f32.gmra.mrb[0].mxu0 %v207
        %v756 = vpop.f32.mrb[0].mxu0
        %v757 = vadd.f32 0.0, %v756
        %v758 = vpop.f32.mrb[0].mxu0
        %759 = vmatprep.mubr.f32.mxu0 %v242
        %760 = vmatmul.mubr.f32.gmra.mrb[0].mxu0 %v209
        %v761 = vpop.f32.mrb[0].mxu0
        %v762 = vadd.f32 0.0, %v761
        %v763 = vpop.f32.mrb[0].mxu0
        %764 = vdwg.mxu0
        %v765 = vmax.f32 %v655, %v747
        %v766 = vmax.f32 %v656, %v752
        %v767 = vmax.f32 %v657, %v757
        %v768 = vmax.f32 %v658, %v762
        %s769 = scalar_lea.vmem %s176, 160 [#allocation2]
        %v770 = vld [vmem:[%s769] sm:$0xff]
        %v771 = vld [vmem:[%s769 + $0x8] sm:$0xff]
        %v772 = vld [vmem:[%s769 + $0x10] sm:$0xff]
        %v773 = vld [vmem:[%s769 + $0x18] sm:$0xff]
        %v774 = vld [vmem:[%s769 + $0x20] sm:$0xff]
        %v775 = vld [vmem:[%s769 + $0x28] sm:$0xff]
        %v776 = vld [vmem:[%s769 + $0x30] sm:$0xff]
        %v777 = vld [vmem:[%s769 + $0x38] sm:$0xff]
        %v778 = vld [vmem:[%s769 + $0x40] sm:$0xff]
        %v779 = vld [vmem:[%s769 + $0x48] sm:$0xff]
        %v780 = vld [vmem:[%s769 + $0x50] sm:$0xff]
        %v781 = vld [vmem:[%s769 + $0x58] sm:$0xff]
        %v782 = vld [vmem:[%s769 + $0x60] sm:$0xff]
        %v783 = vld [vmem:[%s769 + $0x68] sm:$0xff]
        %v784 = vld [vmem:[%s769 + $0x70] sm:$0xff]
        %v785 = vld [vmem:[%s769 + $0x78] sm:$0xff]
        %v786 = vld [vmem:[%s769 + $0x80] sm:$0xff]
        %v787 = vld [vmem:[%s769 + $0x88] sm:$0xff]
        %v788 = vld [vmem:[%s769 + $0x90] sm:$0xff]
        %v789 = vld [vmem:[%s769 + $0x98] sm:$0xff]
        %790 = vmatprep.subr.mxu0 0.0
        %791 = vmatpush1.msra.mxu0 %v770
        %792 = vmatprep.subr.mxu0 0.0
        %793 = vmatpush1.msra.mxu0 %v771
        %794 = vmatprep.subr.mxu0 0.0
        %795 = vmatpush1.msra.mxu0 %v772
        %796 = vmatprep.subr.mxu0 0.0
        %797 = vmatpush1.msra.mxu0 %v773
        %798 = vmatprep.subr.mxu0 0.0
        %799 = vmatpush1.msra.mxu0 %v774
        %800 = vmatprep.subr.mxu0 0.0
        %801 = vmatpush1.msra.mxu0 %v775
        %802 = vmatprep.subr.mxu0 0.0
        %803 = vmatpush1.msra.mxu0 %v776
        %804 = vmatprep.subr.mxu0 0.0
        %805 = vmatpush1.msra.mxu0 %v777
        %806 = vmatprep.subr.mxu0 0.0
        %807 = vmatpush1.msra.mxu0 %v778
        %808 = vmatprep.subr.mxu0 0.0
        %809 = vmatpush1.msra.mxu0 %v779
        %810 = vmatprep.subr.mxu0 0.0
        %811 = vmatpush1.msra.mxu0 %v780
        %812 = vmatprep.subr.mxu0 0.0
        %813 = vmatpush1.msra.mxu0 %v781
        %814 = vmatprep.subr.mxu0 0.0
        %815 = vmatpush1.msra.mxu0 %v782
        %816 = vmatprep.subr.mxu0 0.0
        %817 = vmatpush1.msra.mxu0 %v783
        %818 = vmatprep.subr.mxu0 0.0
        %819 = vmatpush1.msra.mxu0 %v784
        %820 = vmatprep.subr.mxu0 0.0
        %821 = vmatpush1.msra.mxu0 %v785
        %822 = vmatprep.subr.mxu0 0.0
        %823 = vmatpush1.msra.mxu0 %v786
        %824 = vmatprep.subr.mxu0 0.0
        %825 = vmatpush1.msra.mxu0 %v787
        %826 = vmatprep.subr.mxu0 0.0
        %827 = vmatpush1.msra.mxu0 %v788
        %828 = vmatprep.subr.mxu0 0.0
        %829 = vmatpush1.msra.mxu0 %v789
        %830 = vmatprep.subr.mxu0 0.0
        %831 = vmatpush1.msra.mxu0 0.0
        %832 = vmatprep.subr.mxu0 0.0
        %833 = vmatpush1.msra.mxu0 0.0
        %834 = vmatprep.subr.mxu0 0.0
        %835 = vmatpush1.msra.mxu0 0.0
        %836 = vmatprep.subr.mxu0 0.0
        %837 = vmatpush1.msra.mxu0 0.0
        %838 = vmatprep.subr.mxu0 0.0
        %839 = vmatpush1.msra.mxu0 0.0
        %840 = vmatprep.subr.mxu0 0.0
        %841 = vmatpush1.msra.mxu0 0.0
        %842 = vmatprep.subr.mxu0 0.0
        %843 = vmatpush1.msra.mxu0 0.0
        %844 = vmatprep.subr.mxu0 0.0
        %845 = vmatpush1.msra.mxu0 0.0
        %846 = vmatprep.subr.mxu0 0.0
        %847 = vmatpush1.msra.mxu0 0.0
        %848 = vmatprep.subr.mxu0 0.0
        %849 = vmatpush1.msra.mxu0 0.0
        %850 = vmatprep.subr.mxu0 0.0
        %851 = vmatpush1.msra.mxu0 0.0
        %852 = vmatprep.subr.mxu0 0.0
        %853 = vmatpush1.msra.mxu0 0.0
        %854 = vmatprep.mubr.f32.mxu0 %v233
        %855 = vmatmul.mubr.f32.gmra.mrb[0].mxu0 %v203
        %v856 = vpop.f32.mrb[0].mxu0
        %v857 = vadd.f32 0.0, %v856
        %v858 = vpop.f32.mrb[0].mxu0
        %859 = vmatprep.mubr.f32.mxu0 %v236
        %860 = vmatmul.mubr.f32.gmra.mrb[0].mxu0 %v205
        %v861 = vpop.f32.mrb[0].mxu0
        %v862 = vadd.f32 0.0, %v861
        %v863 = vpop.f32.mrb[0].mxu0
        %864 = vmatprep.mubr.f32.mxu0 %v239
        %865 = vmatmul.mubr.f32.gmra.mrb[0].mxu0 %v207
        %v866 = vpop.f32.mrb[0].mxu0
        %v867 = vadd.f32 0.0, %v866
        %v868 = vpop.f32.mrb[0].mxu0
        %869 = vmatprep.mubr.f32.mxu0 %v242
        %870 = vmatmul.mubr.f32.gmra.mrb[0].mxu0 %v209
        %v871 = vpop.f32.mrb[0].mxu0
        %v872 = vadd.f32 0.0, %v871
        %v873 = vpop.f32.mrb[0].mxu0
        %874 = vdwg.mxu0
        %v875 = vmax.f32 %v765, %v857
        %v876 = vmax.f32 %v766, %v862
        %v877 = vmax.f32 %v767, %v867
        %v878 = vmax.f32 %v768, %v872
        %s879 = scalar_lea.vmem %s176, 192 [#allocation2]
        %v880 = vld [vmem:[%s879] sm:$0xff]
        %v881 = vld [vmem:[%s879 + $0x8] sm:$0xff]
        %v882 = vld [vmem:[%s879 + $0x10] sm:$0xff]
        %v883 = vld [vmem:[%s879 + $0x18] sm:$0xff]
        %v884 = vld [vmem:[%s879 + $0x20] sm:$0xff]
        %v885 = vld [vmem:[%s879 + $0x28] sm:$0xff]
        %v886 = vld [vmem:[%s879 + $0x30] sm:$0xff]
        %v887 = vld [vmem:[%s879 + $0x38] sm:$0xff]
        %v888 = vld [vmem:[%s879 + $0x40] sm:$0xff]
        %v889 = vld [vmem:[%s879 + $0x48] sm:$0xff]
        %v890 = vld [vmem:[%s879 + $0x50] sm:$0xff]
        %v891 = vld [vmem:[%s879 + $0x58] sm:$0xff]
        %v892 = vld [vmem:[%s879 + $0x60] sm:$0xff]
        %v893 = vld [vmem:[%s879 + $0x68] sm:$0xff]
        %v894 = vld [vmem:[%s879 + $0x70] sm:$0xff]
        %v895 = vld [vmem:[%s879 + $0x78] sm:$0xff]
        %v896 = vld [vmem:[%s879 + $0x80] sm:$0xff]
        %v897 = vld [vmem:[%s879 + $0x88] sm:$0xff]
        %v898 = vld [vmem:[%s879 + $0x90] sm:$0xff]
        %v899 = vld [vmem:[%s879 + $0x98] sm:$0xff]
        %900 = vmatprep.subr.mxu0 0.0
        %901 = vmatpush1.msra.mxu0 %v880
        %902 = vmatprep.subr.mxu0 0.0
        %903 = vmatpush1.msra.mxu0 %v881
        %904 = vmatprep.subr.mxu0 0.0
        %905 = vmatpush1.msra.mxu0 %v882
        %906 = vmatprep.subr.mxu0 0.0
        %907 = vmatpush1.msra.mxu0 %v883
        %908 = vmatprep.subr.mxu0 0.0
        %909 = vmatpush1.msra.mxu0 %v884
        %910 = vmatprep.subr.mxu0 0.0
        %911 = vmatpush1.msra.mxu0 %v885
        %912 = vmatprep.subr.mxu0 0.0
        %913 = vmatpush1.msra.mxu0 %v886
        %914 = vmatprep.subr.mxu0 0.0
        %915 = vmatpush1.msra.mxu0 %v887
        %916 = vmatprep.subr.mxu0 0.0
        %917 = vmatpush1.msra.mxu0 %v888
        %918 = vmatprep.subr.mxu0 0.0
        %919 = vmatpush1.msra.mxu0 %v889
        %920 = vmatprep.subr.mxu0 0.0
        %921 = vmatpush1.msra.mxu0 %v890
        %922 = vmatprep.subr.mxu0 0.0
        %923 = vmatpush1.msra.mxu0 %v891
        %924 = vmatprep.subr.mxu0 0.0
        %925 = vmatpush1.msra.mxu0 %v892
        %926 = vmatprep.subr.mxu0 0.0
        %927 = vmatpush1.msra.mxu0 %v893
        %928 = vmatprep.subr.mxu0 0.0
        %929 = vmatpush1.msra.mxu0 %v894
        %930 = vmatprep.subr.mxu0 0.0
        %931 = vmatpush1.msra.mxu0 %v895
        %932 = vmatprep.subr.mxu0 0.0
        %933 = vmatpush1.msra.mxu0 %v896
        %934 = vmatprep.subr.mxu0 0.0
        %935 = vmatpush1.msra.mxu0 %v897
        %936 = vmatprep.subr.mxu0 0.0
        %937 = vmatpush1.msra.mxu0 %v898
        %938 = vmatprep.subr.mxu0 0.0
        %939 = vmatpush1.msra.mxu0 %v899
        %940 = vmatprep.subr.mxu0 0.0
        %941 = vmatpush1.msra.mxu0 0.0
        %942 = vmatprep.subr.mxu0 0.0
        %943 = vmatpush1.msra.mxu0 0.0
        %944 = vmatprep.subr.mxu0 0.0
        %945 = vmatpush1.msra.mxu0 0.0
        %946 = vmatprep.subr.mxu0 0.0
        %947 = vmatpush1.msra.mxu0 0.0
        %948 = vmatprep.subr.mxu0 0.0
        %949 = vmatpush1.msra.mxu0 0.0
        %950 = vmatprep.subr.mxu0 0.0
        %951 = vmatpush1.msra.mxu0 0.0
        %952 = vmatprep.subr.mxu0 0.0
        %953 = vmatpush1.msra.mxu0 0.0
        %954 = vmatprep.subr.mxu0 0.0
        %955 = vmatpush1.msra.mxu0 0.0
        %956 = vmatprep.subr.mxu0 0.0
        %957 = vmatpush1.msra.mxu0 0.0
        %958 = vmatprep.subr.mxu0 0.0
        %959 = vmatpush1.msra.mxu0 0.0
        %960 = vmatprep.subr.mxu0 0.0
        %961 = vmatpush1.msra.mxu0 0.0
        %962 = vmatprep.subr.mxu0 0.0
        %963 = vmatpush1.msra.mxu0 0.0
        %964 = vmatprep.mubr.f32.mxu0 %v233
        %965 = vmatmul.mubr.f32.gmra.mrb[0].mxu0 %v203
        %v966 = vpop.f32.mrb[0].mxu0
        %v967 = vadd.f32 0.0, %v966
        %v968 = vpop.f32.mrb[0].mxu0
        %969 = vmatprep.mubr.f32.mxu0 %v236
        %970 = vmatmul.mubr.f32.gmra.mrb[0].mxu0 %v205
        %v971 = vpop.f32.mrb[0].mxu0
        %v972 = vadd.f32 0.0, %v971
        %v973 = vpop.f32.mrb[0].mxu0
        %974 = vmatprep.mubr.f32.mxu0 %v239
        %975 = vmatmul.mubr.f32.gmra.mrb[0].mxu0 %v207
        %v976 = vpop.f32.mrb[0].mxu0
        %v977 = vadd.f32 0.0, %v976
        %v978 = vpop.f32.mrb[0].mxu0
        %979 = vmatprep.mubr.f32.mxu0 %v242
        %980 = vmatmul.mubr.f32.gmra.mrb[0].mxu0 %v209
        %v981 = vpop.f32.mrb[0].mxu0
        %v982 = vadd.f32 0.0, %v981
        %v983 = vpop.f32.mrb[0].mxu0
        %984 = vdwg.mxu0
        %v985 = vmax.f32 %v875, %v967
        %v986 = vmax.f32 %v876, %v972
        %v987 = vmax.f32 %v877, %v977
        %v988 = vmax.f32 %v878, %v982
        %s989 = scalar_lea.vmem %s176, 224 [#allocation2]
        %v990 = vld [vmem:[%s989] sm:$0xff]
        %v991 = vld [vmem:[%s989 + $0x8] sm:$0xff]
        %v992 = vld [vmem:[%s989 + $0x10] sm:$0xff]
        %v993 = vld [vmem:[%s989 + $0x18] sm:$0xff]
        %v994 = vld [vmem:[%s989 + $0x20] sm:$0xff]
        %v995 = vld [vmem:[%s989 + $0x28] sm:$0xff]
        %v996 = vld [vmem:[%s989 + $0x30] sm:$0xff]
        %v997 = vld [vmem:[%s989 + $0x38] sm:$0xff]
        %v998 = vld [vmem:[%s989 + $0x40] sm:$0xff]
        %v999 = vld [vmem:[%s989 + $0x48] sm:$0xff]
        %v1000 = vld [vmem:[%s989 + $0x50] sm:$0xff]
        %v1001 = vld [vmem:[%s989 + $0x58] sm:$0xff]
        %v1002 = vld [vmem:[%s989 + $0x60] sm:$0xff]
        %v1003 = vld [vmem:[%s989 + $0x68] sm:$0xff]
        %v1004 = vld [vmem:[%s989 + $0x70] sm:$0xff]
        %v1005 = vld [vmem:[%s989 + $0x78] sm:$0xff]
        %v1006 = vld [vmem:[%s989 + $0x80] sm:$0xff]
        %v1007 = vld [vmem:[%s989 + $0x88] sm:$0xff]
        %v1008 = vld [vmem:[%s989 + $0x90] sm:$0xff]
        %v1009 = vld [vmem:[%s989 + $0x98] sm:$0xff]
        %1010 = vmatprep.subr.mxu0 0.0
        %1011 = vmatpush1.msra.mxu0 %v990
        %1012 = vmatprep.subr.mxu0 0.0
        %1013 = vmatpush1.msra.mxu0 %v991
        %1014 = vmatprep.subr.mxu0 0.0
        %1015 = vmatpush1.msra.mxu0 %v992
        %1016 = vmatprep.subr.mxu0 0.0
        %1017 = vmatpush1.msra.mxu0 %v993
        %1018 = vmatprep.subr.mxu0 0.0
        %1019 = vmatpush1.msra.mxu0 %v994
        %1020 = vmatprep.subr.mxu0 0.0
        %1021 = vmatpush1.msra.mxu0 %v995
        %1022 = vmatprep.subr.mxu0 0.0
        %1023 = vmatpush1.msra.mxu0 %v996
        %1024 = vmatprep.subr.mxu0 0.0
        %1025 = vmatpush1.msra.mxu0 %v997
        %1026 = vmatprep.subr.mxu0 0.0
        %1027 = vmatpush1.msra.mxu0 %v998
        %1028 = vmatprep.subr.mxu0 0.0
        %1029 = vmatpush1.msra.mxu0 %v999
        %1030 = vmatprep.subr.mxu0 0.0
        %1031 = vmatpush1.msra.mxu0 %v1000
        %1032 = vmatprep.subr.mxu0 0.0
        %1033 = vmatpush1.msra.mxu0 %v1001
        %1034 = vmatprep.subr.mxu0 0.0
        %1035 = vmatpush1.msra.mxu0 %v1002
        %1036 = vmatprep.subr.mxu0 0.0
        %1037 = vmatpush1.msra.mxu0 %v1003
        %1038 = vmatprep.subr.mxu0 0.0
        %1039 = vmatpush1.msra.mxu0 %v1004
        %1040 = vmatprep.subr.mxu0 0.0
        %1041 = vmatpush1.msra.mxu0 %v1005
        %1042 = vmatprep.subr.mxu0 0.0
        %1043 = vmatpush1.msra.mxu0 %v1006
        %1044 = vmatprep.subr.mxu0 0.0
        %1045 = vmatpush1.msra.mxu0 %v1007
        %1046 = vmatprep.subr.mxu0 0.0
        %1047 = vmatpush1.msra.mxu0 %v1008
        %1048 = vmatprep.subr.mxu0 0.0
        %1049 = vmatpush1.msra.mxu0 %v1009
        %1050 = vmatprep.subr.mxu0 0.0
        %1051 = vmatpush1.msra.mxu0 0.0
        %1052 = vmatprep.subr.mxu0 0.0
        %1053 = vmatpush1.msra.mxu0 0.0
        %1054 = vmatprep.subr.mxu0 0.0
        %1055 = vmatpush1.msra.mxu0 0.0
        %1056 = vmatprep.subr.mxu0 0.0
        %1057 = vmatpush1.msra.mxu0 0.0
        %1058 = vmatprep.subr.mxu0 0.0
        %1059 = vmatpush1.msra.mxu0 0.0
        %1060 = vmatprep.subr.mxu0 0.0
        %1061 = vmatpush1.msra.mxu0 0.0
        %1062 = vmatprep.subr.mxu0 0.0
        %1063 = vmatpush1.msra.mxu0 0.0
        %1064 = vmatprep.subr.mxu0 0.0
        %1065 = vmatpush1.msra.mxu0 0.0
        %1066 = vmatprep.subr.mxu0 0.0
        %1067 = vmatpush1.msra.mxu0 0.0
        %1068 = vmatprep.subr.mxu0 0.0
        %1069 = vmatpush1.msra.mxu0 0.0
        %1070 = vmatprep.subr.mxu0 0.0
        %1071 = vmatpush1.msra.mxu0 0.0
        %1072 = vmatprep.subr.mxu0 0.0
        %1073 = vmatpush1.msra.mxu0 0.0
        %1074 = vmatprep.mubr.f32.mxu0 %v233
        %1075 = vmatmul.mubr.f32.gmra.mrb[0].mxu0 %v203
        %v1076 = vpop.f32.mrb[0].mxu0
        %v1077 = vadd.f32 0.0, %v1076
        %v1078 = vpop.f32.mrb[0].mxu0
        %1079 = vmatprep.mubr.f32.mxu0 %v236
        %1080 = vmatmul.mubr.f32.gmra.mrb[0].mxu0 %v205
        %v1081 = vpop.f32.mrb[0].mxu0
        %v1082 = vadd.f32 0.0, %v1081
        %v1083 = vpop.f32.mrb[0].mxu0
        %1084 = vmatprep.mubr.f32.mxu0 %v239
        %1085 = vmatmul.mubr.f32.gmra.mrb[0].mxu0 %v207
        %v1086 = vpop.f32.mrb[0].mxu0
        %v1087 = vadd.f32 0.0, %v1086
        %v1088 = vpop.f32.mrb[0].mxu0
        %1089 = vmatprep.mubr.f32.mxu0 %v242
        %1090 = vmatmul.mubr.f32.gmra.mrb[0].mxu0 %v209
        %v1091 = vpop.f32.mrb[0].mxu0
        %v1092 = vadd.f32 0.0, %v1091
        %v1093 = vpop.f32.mrb[0].mxu0
        %1094 = vdwg.mxu0
        %v1095 = vmax.f32 %v985, %v1077
        %v1096 = vmax.f32 %v986, %v1082
        %v1097 = vmax.f32 %v987, %v1087
        %v1098 = vmax.f32 %v988, %v1092
        %s1099 = scalar_lea.vmem %s176, 256 [#allocation2]
        %v1100 = vld [vmem:[%s1099] sm:$0xff]
        %v1101 = vld [vmem:[%s1099 + $0x8] sm:$0xff]
        %v1102 = vld [vmem:[%s1099 + $0x10] sm:$0xff]
        %v1103 = vld [vmem:[%s1099 + $0x18] sm:$0xff]
        %v1104 = vld [vmem:[%s1099 + $0x20] sm:$0xff]
        %v1105 = vld [vmem:[%s1099 + $0x28] sm:$0xff]
        %v1106 = vld [vmem:[%s1099 + $0x30] sm:$0xff]
        %v1107 = vld [vmem:[%s1099 + $0x38] sm:$0xff]
        %v1108 = vld [vmem:[%s1099 + $0x40] sm:$0xff]
        %v1109 = vld [vmem:[%s1099 + $0x48] sm:$0xff]
        %v1110 = vld [vmem:[%s1099 + $0x50] sm:$0xff]
        %v1111 = vld [vmem:[%s1099 + $0x58] sm:$0xff]
        %v1112 = vld [vmem:[%s1099 + $0x60] sm:$0xff]
        %v1113 = vld [vmem:[%s1099 + $0x68] sm:$0xff]
        %v1114 = vld [vmem:[%s1099 + $0x70] sm:$0xff]
        %v1115 = vld [vmem:[%s1099 + $0x78] sm:$0xff]
        %v1116 = vld [vmem:[%s1099 + $0x80] sm:$0xff]
        %v1117 = vld [vmem:[%s1099 + $0x88] sm:$0xff]
        %v1118 = vld [vmem:[%s1099 + $0x90] sm:$0xff]
        %v1119 = vld [vmem:[%s1099 + $0x98] sm:$0xff]
        %1120 = vmatprep.subr.mxu0 0.0
        %1121 = vmatpush1.msra.mxu0 %v1100
        %1122 = vmatprep.subr.mxu0 0.0
        %1123 = vmatpush1.msra.mxu0 %v1101
        %1124 = vmatprep.subr.mxu0 0.0
        %1125 = vmatpush1.msra.mxu0 %v1102
        %1126 = vmatprep.subr.mxu0 0.0
        %1127 = vmatpush1.msra.mxu0 %v1103
        %1128 = vmatprep.subr.mxu0 0.0
        %1129 = vmatpush1.msra.mxu0 %v1104
        %1130 = vmatprep.subr.mxu0 0.0
        %1131 = vmatpush1.msra.mxu0 %v1105
        %1132 = vmatprep.subr.mxu0 0.0
        %1133 = vmatpush1.msra.mxu0 %v1106
        %1134 = vmatprep.subr.mxu0 0.0
        %1135 = vmatpush1.msra.mxu0 %v1107
        %1136 = vmatprep.subr.mxu0 0.0
        %1137 = vmatpush1.msra.mxu0 %v1108
        %1138 = vmatprep.subr.mxu0 0.0
        %1139 = vmatpush1.msra.mxu0 %v1109
        %1140 = vmatprep.subr.mxu0 0.0
        %1141 = vmatpush1.msra.mxu0 %v1110
        %1142 = vmatprep.subr.mxu0 0.0
        %1143 = vmatpush1.msra.mxu0 %v1111
        %1144 = vmatprep.subr.mxu0 0.0
        %1145 = vmatpush1.msra.mxu0 %v1112
        %1146 = vmatprep.subr.mxu0 0.0
        %1147 = vmatpush1.msra.mxu0 %v1113
        %1148 = vmatprep.subr.mxu0 0.0
        %1149 = vmatpush1.msra.mxu0 %v1114
        %1150 = vmatprep.subr.mxu0 0.0
        %1151 = vmatpush1.msra.mxu0 %v1115
        %1152 = vmatprep.subr.mxu0 0.0
        %1153 = vmatpush1.msra.mxu0 %v1116
        %1154 = vmatprep.subr.mxu0 0.0
        %1155 = vmatpush1.msra.mxu0 %v1117
        %1156 = vmatprep.subr.mxu0 0.0
        %1157 = vmatpush1.msra.mxu0 %v1118
        %1158 = vmatprep.subr.mxu0 0.0
        %1159 = vmatpush1.msra.mxu0 %v1119
        %1160 = vmatprep.subr.mxu0 0.0
        %1161 = vmatpush1.msra.mxu0 0.0
        %1162 = vmatprep.subr.mxu0 0.0
        %1163 = vmatpush1.msra.mxu0 0.0
        %1164 = vmatprep.subr.mxu0 0.0
        %1165 = vmatpush1.msra.mxu0 0.0
        %1166 = vmatprep.subr.mxu0 0.0
        %1167 = vmatpush1.msra.mxu0 0.0
        %1168 = vmatprep.subr.mxu0 0.0
        %1169 = vmatpush1.msra.mxu0 0.0
        %1170 = vmatprep.subr.mxu0 0.0
        %1171 = vmatpush1.msra.mxu0 0.0
        %1172 = vmatprep.subr.mxu0 0.0
        %1173 = vmatpush1.msra.mxu0 0.0
        %1174 = vmatprep.subr.mxu0 0.0
        %1175 = vmatpush1.msra.mxu0 0.0
        %1176 = vmatprep.subr.mxu0 0.0
        %1177 = vmatpush1.msra.mxu0 0.0
        %1178 = vmatprep.subr.mxu0 0.0
        %1179 = vmatpush1.msra.mxu0 0.0
        %1180 = vmatprep.subr.mxu0 0.0
        %1181 = vmatpush1.msra.mxu0 0.0
        %1182 = vmatprep.subr.mxu0 0.0
        %1183 = vmatpush1.msra.mxu0 0.0
        %1184 = vmatprep.mubr.f32.mxu0 %v233
        %1185 = vmatmul.mubr.f32.gmra.mrb[0].mxu0 %v203
        %v1186 = vpop.f32.mrb[0].mxu0
        %v1187 = vadd.f32 0.0, %v1186
        %v1188 = vpop.f32.mrb[0].mxu0
        %1189 = vmatprep.mubr.f32.mxu0 %v236
        %1190 = vmatmul.mubr.f32.gmra.mrb[0].mxu0 %v205
        %v1191 = vpop.f32.mrb[0].mxu0
        %v1192 = vadd.f32 0.0, %v1191
        %v1193 = vpop.f32.mrb[0].mxu0
        %1194 = vmatprep.mubr.f32.mxu0 %v239
        %1195 = vmatmul.mubr.f32.gmra.mrb[0].mxu0 %v207
        %v1196 = vpop.f32.mrb[0].mxu0
        %v1197 = vadd.f32 0.0, %v1196
        %v1198 = vpop.f32.mrb[0].mxu0
        %1199 = vmatprep.mubr.f32.mxu0 %v242
        %1200 = vmatmul.mubr.f32.gmra.mrb[0].mxu0 %v209
        %v1201 = vpop.f32.mrb[0].mxu0
        %v1202 = vadd.f32 0.0, %v1201
        %v1203 = vpop.f32.mrb[0].mxu0
        %1204 = vdwg.mxu0
        %v1205 = vmax.f32 %v1095, %v1187
        %v1206 = vmax.f32 %v1096, %v1192
        %v1207 = vmax.f32 %v1097, %v1197
        %v1208 = vmax.f32 %v1098, %v1202
        %s1209 = scalar_lea.vmem %s176, 288 [#allocation2]
        %v1210 = vld [vmem:[%s1209] sm:$0xff]
        %v1211 = vld [vmem:[%s1209 + $0x8] sm:$0xff]
        %v1212 = vld [vmem:[%s1209 + $0x10] sm:$0xff]
        %v1213 = vld [vmem:[%s1209 + $0x18] sm:$0xff]
        %v1214 = vld [vmem:[%s1209 + $0x20] sm:$0xff]
        %v1215 = vld [vmem:[%s1209 + $0x28] sm:$0xff]
        %v1216 = vld [vmem:[%s1209 + $0x30] sm:$0xff]
        %v1217 = vld [vmem:[%s1209 + $0x38] sm:$0xff]
        %v1218 = vld [vmem:[%s1209 + $0x40] sm:$0xff]
        %v1219 = vld [vmem:[%s1209 + $0x48] sm:$0xff]
        %v1220 = vld [vmem:[%s1209 + $0x50] sm:$0xff]
        %v1221 = vld [vmem:[%s1209 + $0x58] sm:$0xff]
        %v1222 = vld [vmem:[%s1209 + $0x60] sm:$0xff]
        %v1223 = vld [vmem:[%s1209 + $0x68] sm:$0xff]
        %v1224 = vld [vmem:[%s1209 + $0x70] sm:$0xff]
        %v1225 = vld [vmem:[%s1209 + $0x78] sm:$0xff]
        %v1226 = vld [vmem:[%s1209 + $0x80] sm:$0xff]
        %v1227 = vld [vmem:[%s1209 + $0x88] sm:$0xff]
        %v1228 = vld [vmem:[%s1209 + $0x90] sm:$0xff]
        %v1229 = vld [vmem:[%s1209 + $0x98] sm:$0xff]
        %1230 = vmatprep.subr.mxu0 0.0
        %1231 = vmatpush1.msra.mxu0 %v1210
        %1232 = vmatprep.subr.mxu0 0.0
        %1233 = vmatpush1.msra.mxu0 %v1211
        %1234 = vmatprep.subr.mxu0 0.0
        %1235 = vmatpush1.msra.mxu0 %v1212
        %1236 = vmatprep.subr.mxu0 0.0
        %1237 = vmatpush1.msra.mxu0 %v1213
        %1238 = vmatprep.subr.mxu0 0.0
        %1239 = vmatpush1.msra.mxu0 %v1214
        %1240 = vmatprep.subr.mxu0 0.0
        %1241 = vmatpush1.msra.mxu0 %v1215
        %1242 = vmatprep.subr.mxu0 0.0
        %1243 = vmatpush1.msra.mxu0 %v1216
        %1244 = vmatprep.subr.mxu0 0.0
        %1245 = vmatpush1.msra.mxu0 %v1217
        %1246 = vmatprep.subr.mxu0 0.0
        %1247 = vmatpush1.msra.mxu0 %v1218
        %1248 = vmatprep.subr.mxu0 0.0
        %1249 = vmatpush1.msra.mxu0 %v1219
        %1250 = vmatprep.subr.mxu0 0.0
        %1251 = vmatpush1.msra.mxu0 %v1220
        %1252 = vmatprep.subr.mxu0 0.0
        %1253 = vmatpush1.msra.mxu0 %v1221
        %1254 = vmatprep.subr.mxu0 0.0
        %1255 = vmatpush1.msra.mxu0 %v1222
        %1256 = vmatprep.subr.mxu0 0.0
        %1257 = vmatpush1.msra.mxu0 %v1223
        %1258 = vmatprep.subr.mxu0 0.0
        %1259 = vmatpush1.msra.mxu0 %v1224
        %1260 = vmatprep.subr.mxu0 0.0
        %1261 = vmatpush1.msra.mxu0 %v1225
        %1262 = vmatprep.subr.mxu0 0.0
        %1263 = vmatpush1.msra.mxu0 %v1226
        %1264 = vmatprep.subr.mxu0 0.0
        %1265 = vmatpush1.msra.mxu0 %v1227
        %1266 = vmatprep.subr.mxu0 0.0
        %1267 = vmatpush1.msra.mxu0 %v1228
        %1268 = vmatprep.subr.mxu0 0.0
        %1269 = vmatpush1.msra.mxu0 %v1229
        %1270 = vmatprep.subr.mxu0 0.0
        %1271 = vmatpush1.msra.mxu0 0.0
        %1272 = vmatprep.subr.mxu0 0.0
        %1273 = vmatpush1.msra.mxu0 0.0
        %1274 = vmatprep.subr.mxu0 0.0
        %1275 = vmatpush1.msra.mxu0 0.0
        %1276 = vmatprep.subr.mxu0 0.0
        %1277 = vmatpush1.msra.mxu0 0.0
        %1278 = vmatprep.subr.mxu0 0.0
        %1279 = vmatpush1.msra.mxu0 0.0
        %1280 = vmatprep.subr.mxu0 0.0
        %1281 = vmatpush1.msra.mxu0 0.0
        %1282 = vmatprep.subr.mxu0 0.0
        %1283 = vmatpush1.msra.mxu0 0.0
        %1284 = vmatprep.subr.mxu0 0.0
        %1285 = vmatpush1.msra.mxu0 0.0
        %1286 = vmatprep.subr.mxu0 0.0
        %1287 = vmatpush1.msra.mxu0 0.0
        %1288 = vmatprep.subr.mxu0 0.0
        %1289 = vmatpush1.msra.mxu0 0.0
        %1290 = vmatprep.subr.mxu0 0.0
        %1291 = vmatpush1.msra.mxu0 0.0
        %1292 = vmatprep.subr.mxu0 0.0
        %1293 = vmatpush1.msra.mxu0 0.0
        %1294 = vmatprep.mubr.f32.mxu0 %v233
        %1295 = vmatmul.mubr.f32.gmra.mrb[0].mxu0 %v203
        %v1296 = vpop.f32.mrb[0].mxu0
        %v1297 = vadd.f32 0.0, %v1296
        %v1298 = vpop.f32.mrb[0].mxu0
        %1299 = vmatprep.mubr.f32.mxu0 %v236
        %1300 = vmatmul.mubr.f32.gmra.mrb[0].mxu0 %v205
        %v1301 = vpop.f32.mrb[0].mxu0
        %v1302 = vadd.f32 0.0, %v1301
        %v1303 = vpop.f32.mrb[0].mxu0
        %1304 = vmatprep.mubr.f32.mxu0 %v239
        %1305 = vmatmul.mubr.f32.gmra.mrb[0].mxu0 %v207
        %v1306 = vpop.f32.mrb[0].mxu0
        %v1307 = vadd.f32 0.0, %v1306
        %v1308 = vpop.f32.mrb[0].mxu0
        %1309 = vmatprep.mubr.f32.mxu0 %v242
        %1310 = vmatmul.mubr.f32.gmra.mrb[0].mxu0 %v209
        %v1311 = vpop.f32.mrb[0].mxu0
        %v1312 = vadd.f32 0.0, %v1311
        %v1313 = vpop.f32.mrb[0].mxu0
        %1314 = vdwg.mxu0
        %v1315 = vmax.f32 %v1205, %v1297
        %v1316 = vmax.f32 %v1206, %v1302
        %v1317 = vmax.f32 %v1207, %v1307
        %v1318 = vmax.f32 %v1208, %v1312
        %s1319 = scalar_lea.vmem %s176, 320 [#allocation2]
        %v1320 = vld [vmem:[%s1319] sm:$0xff]
        %v1321 = vld [vmem:[%s1319 + $0x8] sm:$0xff]
        %v1322 = vld [vmem:[%s1319 + $0x10] sm:$0xff]
        %v1323 = vld [vmem:[%s1319 + $0x18] sm:$0xff]
        %v1324 = vld [vmem:[%s1319 + $0x20] sm:$0xff]
        %v1325 = vld [vmem:[%s1319 + $0x28] sm:$0xff]
        %v1326 = vld [vmem:[%s1319 + $0x30] sm:$0xff]
        %v1327 = vld [vmem:[%s1319 + $0x38] sm:$0xff]
        %v1328 = vld [vmem:[%s1319 + $0x40] sm:$0xff]
        %v1329 = vld [vmem:[%s1319 + $0x48] sm:$0xff]
        %v1330 = vld [vmem:[%s1319 + $0x50] sm:$0xff]
        %v1331 = vld [vmem:[%s1319 + $0x58] sm:$0xff]
        %v1332 = vld [vmem:[%s1319 + $0x60] sm:$0xff]
        %v1333 = vld [vmem:[%s1319 + $0x68] sm:$0xff]
        %v1334 = vld [vmem:[%s1319 + $0x70] sm:$0xff]
        %v1335 = vld [vmem:[%s1319 + $0x78] sm:$0xff]
        %v1336 = vld [vmem:[%s1319 + $0x80] sm:$0xff]
        %v1337 = vld [vmem:[%s1319 + $0x88] sm:$0xff]
        %v1338 = vld [vmem:[%s1319 + $0x90] sm:$0xff]
        %v1339 = vld [vmem:[%s1319 + $0x98] sm:$0xff]
        %1340 = vmatprep.subr.mxu0 0.0
        %1341 = vmatpush1.msra.mxu0 %v1320
        %1342 = vmatprep.subr.mxu0 0.0
        %1343 = vmatpush1.msra.mxu0 %v1321
        %1344 = vmatprep.subr.mxu0 0.0
        %1345 = vmatpush1.msra.mxu0 %v1322
        %1346 = vmatprep.subr.mxu0 0.0
        %1347 = vmatpush1.msra.mxu0 %v1323
        %1348 = vmatprep.subr.mxu0 0.0
        %1349 = vmatpush1.msra.mxu0 %v1324
        %1350 = vmatprep.subr.mxu0 0.0
        %1351 = vmatpush1.msra.mxu0 %v1325
        %1352 = vmatprep.subr.mxu0 0.0
        %1353 = vmatpush1.msra.mxu0 %v1326
        %1354 = vmatprep.subr.mxu0 0.0
        %1355 = vmatpush1.msra.mxu0 %v1327
        %1356 = vmatprep.subr.mxu0 0.0
        %1357 = vmatpush1.msra.mxu0 %v1328
        %1358 = vmatprep.subr.mxu0 0.0
        %1359 = vmatpush1.msra.mxu0 %v1329
        %1360 = vmatprep.subr.mxu0 0.0
        %1361 = vmatpush1.msra.mxu0 %v1330
        %1362 = vmatprep.subr.mxu0 0.0
        %1363 = vmatpush1.msra.mxu0 %v1331
        %1364 = vmatprep.subr.mxu0 0.0
        %1365 = vmatpush1.msra.mxu0 %v1332
        %1366 = vmatprep.subr.mxu0 0.0
        %1367 = vmatpush1.msra.mxu0 %v1333
        %1368 = vmatprep.subr.mxu0 0.0
        %1369 = vmatpush1.msra.mxu0 %v1334
        %1370 = vmatprep.subr.mxu0 0.0
        %1371 = vmatpush1.msra.mxu0 %v1335
        %1372 = vmatprep.subr.mxu0 0.0
        %1373 = vmatpush1.msra.mxu0 %v1336
        %1374 = vmatprep.subr.mxu0 0.0
        %1375 = vmatpush1.msra.mxu0 %v1337
        %1376 = vmatprep.subr.mxu0 0.0
        %1377 = vmatpush1.msra.mxu0 %v1338
        %1378 = vmatprep.subr.mxu0 0.0
        %1379 = vmatpush1.msra.mxu0 %v1339
        %1380 = vmatprep.subr.mxu0 0.0
        %1381 = vmatpush1.msra.mxu0 0.0
        %1382 = vmatprep.subr.mxu0 0.0
        %1383 = vmatpush1.msra.mxu0 0.0
        %1384 = vmatprep.subr.mxu0 0.0
        %1385 = vmatpush1.msra.mxu0 0.0
        %1386 = vmatprep.subr.mxu0 0.0
        %1387 = vmatpush1.msra.mxu0 0.0
        %1388 = vmatprep.subr.mxu0 0.0
        %1389 = vmatpush1.msra.mxu0 0.0
        %1390 = vmatprep.subr.mxu0 0.0
        %1391 = vmatpush1.msra.mxu0 0.0
        %1392 = vmatprep.subr.mxu0 0.0
        %1393 = vmatpush1.msra.mxu0 0.0
        %1394 = vmatprep.subr.mxu0 0.0
        %1395 = vmatpush1.msra.mxu0 0.0
        %1396 = vmatprep.subr.mxu0 0.0
        %1397 = vmatpush1.msra.mxu0 0.0
        %1398 = vmatprep.subr.mxu0 0.0
        %1399 = vmatpush1.msra.mxu0 0.0
        %1400 = vmatprep.subr.mxu0 0.0
        %1401 = vmatpush1.msra.mxu0 0.0
        %1402 = vmatprep.subr.mxu0 0.0
        %1403 = vmatpush1.msra.mxu0 0.0
        %1404 = vmatprep.mubr.f32.mxu0 %v233
        %1405 = vmatmul.mubr.f32.gmra.mrb[0].mxu0 %v203
        %v1406 = vpop.f32.mrb[0].mxu0
        %v1407 = vadd.f32 0.0, %v1406
        %v1408 = vpop.f32.mrb[0].mxu0
        %1409 = vmatprep.mubr.f32.mxu0 %v236
        %1410 = vmatmul.mubr.f32.gmra.mrb[0].mxu0 %v205
        %v1411 = vpop.f32.mrb[0].mxu0
        %v1412 = vadd.f32 0.0, %v1411
        %v1413 = vpop.f32.mrb[0].mxu0
        %1414 = vmatprep.mubr.f32.mxu0 %v239
        %1415 = vmatmul.mubr.f32.gmra.mrb[0].mxu0 %v207
        %v1416 = vpop.f32.mrb[0].mxu0
        %v1417 = vadd.f32 0.0, %v1416
        %v1418 = vpop.f32.mrb[0].mxu0
        %1419 = vmatprep.mubr.f32.mxu0 %v242
        %1420 = vmatmul.mubr.f32.gmra.mrb[0].mxu0 %v209
        %v1421 = vpop.f32.mrb[0].mxu0
        %v1422 = vadd.f32 0.0, %v1421
        %v1423 = vpop.f32.mrb[0].mxu0
        %1424 = vdwg.mxu0
        %v1425 = vmax.f32 %v1315, %v1407
        %v1426 = vmax.f32 %v1316, %v1412
        %v1427 = vmax.f32 %v1317, %v1417
        %v1428 = vmax.f32 %v1318, %v1422
        %s1429 = scalar_lea.vmem %s176, 352 [#allocation2]
        %v1430 = vld [vmem:[%s1429] sm:$0xff]
        %v1431 = vld [vmem:[%s1429 + $0x8] sm:$0xff]
        %v1432 = vld [vmem:[%s1429 + $0x10] sm:$0xff]
        %v1433 = vld [vmem:[%s1429 + $0x18] sm:$0xff]
        %v1434 = vld [vmem:[%s1429 + $0x20] sm:$0xff]
        %v1435 = vld [vmem:[%s1429 + $0x28] sm:$0xff]
        %v1436 = vld [vmem:[%s1429 + $0x30] sm:$0xff]
        %v1437 = vld [vmem:[%s1429 + $0x38] sm:$0xff]
        %v1438 = vld [vmem:[%s1429 + $0x40] sm:$0xff]
        %v1439 = vld [vmem:[%s1429 + $0x48] sm:$0xff]
        %v1440 = vld [vmem:[%s1429 + $0x50] sm:$0xff]
        %v1441 = vld [vmem:[%s1429 + $0x58] sm:$0xff]
        %v1442 = vld [vmem:[%s1429 + $0x60] sm:$0xff]
        %v1443 = vld [vmem:[%s1429 + $0x68] sm:$0xff]
        %v1444 = vld [vmem:[%s1429 + $0x70] sm:$0xff]
        %v1445 = vld [vmem:[%s1429 + $0x78] sm:$0xff]
        %v1446 = vld [vmem:[%s1429 + $0x80] sm:$0xff]
        %v1447 = vld [vmem:[%s1429 + $0x88] sm:$0xff]
        %v1448 = vld [vmem:[%s1429 + $0x90] sm:$0xff]
        %v1449 = vld [vmem:[%s1429 + $0x98] sm:$0xff]
        %1450 = vmatprep.subr.mxu0 0.0
        %1451 = vmatpush1.msra.mxu0 %v1430
        %1452 = vmatprep.subr.mxu0 0.0
        %1453 = vmatpush1.msra.mxu0 %v1431
        %1454 = vmatprep.subr.mxu0 0.0
        %1455 = vmatpush1.msra.mxu0 %v1432
        %1456 = vmatprep.subr.mxu0 0.0
        %1457 = vmatpush1.msra.mxu0 %v1433
        %1458 = vmatprep.subr.mxu0 0.0
        %1459 = vmatpush1.msra.mxu0 %v1434
        %1460 = vmatprep.subr.mxu0 0.0
        %1461 = vmatpush1.msra.mxu0 %v1435
        %1462 = vmatprep.subr.mxu0 0.0
        %1463 = vmatpush1.msra.mxu0 %v1436
        %1464 = vmatprep.subr.mxu0 0.0
        %1465 = vmatpush1.msra.mxu0 %v1437
        %1466 = vmatprep.subr.mxu0 0.0
        %1467 = vmatpush1.msra.mxu0 %v1438
        %1468 = vmatprep.subr.mxu0 0.0
        %1469 = vmatpush1.msra.mxu0 %v1439
        %1470 = vmatprep.subr.mxu0 0.0
        %1471 = vmatpush1.msra.mxu0 %v1440
        %1472 = vmatprep.subr.mxu0 0.0
        %1473 = vmatpush1.msra.mxu0 %v1441
        %1474 = vmatprep.subr.mxu0 0.0
        %1475 = vmatpush1.msra.mxu0 %v1442
        %1476 = vmatprep.subr.mxu0 0.0
        %1477 = vmatpush1.msra.mxu0 %v1443
        %1478 = vmatprep.subr.mxu0 0.0
        %1479 = vmatpush1.msra.mxu0 %v1444
        %1480 = vmatprep.subr.mxu0 0.0
        %1481 = vmatpush1.msra.mxu0 %v1445
        %1482 = vmatprep.subr.mxu0 0.0
        %1483 = vmatpush1.msra.mxu0 %v1446
        %1484 = vmatprep.subr.mxu0 0.0
        %1485 = vmatpush1.msra.mxu0 %v1447
        %1486 = vmatprep.subr.mxu0 0.0
        %1487 = vmatpush1.msra.mxu0 %v1448
        %1488 = vmatprep.subr.mxu0 0.0
        %1489 = vmatpush1.msra.mxu0 %v1449
        %1490 = vmatprep.subr.mxu0 0.0
        %1491 = vmatpush1.msra.mxu0 0.0
        %1492 = vmatprep.subr.mxu0 0.0
        %1493 = vmatpush1.msra.mxu0 0.0
        %1494 = vmatprep.subr.mxu0 0.0
        %1495 = vmatpush1.msra.mxu0 0.0
        %1496 = vmatprep.subr.mxu0 0.0
        %1497 = vmatpush1.msra.mxu0 0.0
        %1498 = vmatprep.subr.mxu0 0.0
        %1499 = vmatpush1.msra.mxu0 0.0
        %1500 = vmatprep.subr.mxu0 0.0
        %1501 = vmatpush1.msra.mxu0 0.0
        %1502 = vmatprep.subr.mxu0 0.0
        %1503 = vmatpush1.msra.mxu0 0.0
        %1504 = vmatprep.subr.mxu0 0.0
        %1505 = vmatpush1.msra.mxu0 0.0
        %1506 = vmatprep.subr.mxu0 0.0
        %1507 = vmatpush1.msra.mxu0 0.0
        %1508 = vmatprep.subr.mxu0 0.0
        %1509 = vmatpush1.msra.mxu0 0.0
        %1510 = vmatprep.subr.mxu0 0.0
        %1511 = vmatpush1.msra.mxu0 0.0
        %1512 = vmatprep.subr.mxu0 0.0
        %1513 = vmatpush1.msra.mxu0 0.0
        %1514 = vmatprep.mubr.f32.mxu0 %v233
        %1515 = vmatmul.mubr.f32.gmra.mrb[0].mxu0 %v203
        %v1516 = vpop.f32.mrb[0].mxu0
        %v1517 = vadd.f32 0.0, %v1516
        %v1518 = vpop.f32.mrb[0].mxu0
        %1519 = vmatprep.mubr.f32.mxu0 %v236
        %1520 = vmatmul.mubr.f32.gmra.mrb[0].mxu0 %v205
        %v1521 = vpop.f32.mrb[0].mxu0
        %v1522 = vadd.f32 0.0, %v1521
        %v1523 = vpop.f32.mrb[0].mxu0
        %1524 = vmatprep.mubr.f32.mxu0 %v239
        %1525 = vmatmul.mubr.f32.gmra.mrb[0].mxu0 %v207
        %v1526 = vpop.f32.mrb[0].mxu0
        %v1527 = vadd.f32 0.0, %v1526
        %v1528 = vpop.f32.mrb[0].mxu0
        %1529 = vmatprep.mubr.f32.mxu0 %v242
        %1530 = vmatmul.mubr.f32.gmra.mrb[0].mxu0 %v209
        %v1531 = vpop.f32.mrb[0].mxu0
        %v1532 = vadd.f32 0.0, %v1531
        %v1533 = vpop.f32.mrb[0].mxu0
        %1534 = vdwg.mxu0
        %v1535 = vmax.f32 %v1425, %v1517
        %v1536 = vmax.f32 %v1426, %v1522
        %v1537 = vmax.f32 %v1427, %v1527
        %v1538 = vmax.f32 %v1428, %v1532
        %s1539 = scalar_lea.vmem %s176, 384 [#allocation2]
        %v1540 = vld [vmem:[%s1539] sm:$0xff]
        %v1541 = vld [vmem:[%s1539 + $0x8] sm:$0xff]
        %v1542 = vld [vmem:[%s1539 + $0x10] sm:$0xff]
        %v1543 = vld [vmem:[%s1539 + $0x18] sm:$0xff]
        %v1544 = vld [vmem:[%s1539 + $0x20] sm:$0xff]
        %v1545 = vld [vmem:[%s1539 + $0x28] sm:$0xff]
        %v1546 = vld [vmem:[%s1539 + $0x30] sm:$0xff]
        %v1547 = vld [vmem:[%s1539 + $0x38] sm:$0xff]
        %v1548 = vld [vmem:[%s1539 + $0x40] sm:$0xff]
        %v1549 = vld [vmem:[%s1539 + $0x48] sm:$0xff]
        %v1550 = vld [vmem:[%s1539 + $0x50] sm:$0xff]
        %v1551 = vld [vmem:[%s1539 + $0x58] sm:$0xff]
        %v1552 = vld [vmem:[%s1539 + $0x60] sm:$0xff]
        %v1553 = vld [vmem:[%s1539 + $0x68] sm:$0xff]
        %v1554 = vld [vmem:[%s1539 + $0x70] sm:$0xff]
        %v1555 = vld [vmem:[%s1539 + $0x78] sm:$0xff]
        %v1556 = vld [vmem:[%s1539 + $0x80] sm:$0xff]
        %v1557 = vld [vmem:[%s1539 + $0x88] sm:$0xff]
        %v1558 = vld [vmem:[%s1539 + $0x90] sm:$0xff]
        %v1559 = vld [vmem:[%s1539 + $0x98] sm:$0xff]
        %1560 = vmatprep.subr.mxu0 0.0
        %1561 = vmatpush1.msra.mxu0 %v1540
        %1562 = vmatprep.subr.mxu0 0.0
        %1563 = vmatpush1.msra.mxu0 %v1541
        %1564 = vmatprep.subr.mxu0 0.0
        %1565 = vmatpush1.msra.mxu0 %v1542
        %1566 = vmatprep.subr.mxu0 0.0
        %1567 = vmatpush1.msra.mxu0 %v1543
        %1568 = vmatprep.subr.mxu0 0.0
        %1569 = vmatpush1.msra.mxu0 %v1544
        %1570 = vmatprep.subr.mxu0 0.0
        %1571 = vmatpush1.msra.mxu0 %v1545
        %1572 = vmatprep.subr.mxu0 0.0
        %1573 = vmatpush1.msra.mxu0 %v1546
        %1574 = vmatprep.subr.mxu0 0.0
        %1575 = vmatpush1.msra.mxu0 %v1547
        %1576 = vmatprep.subr.mxu0 0.0
        %1577 = vmatpush1.msra.mxu0 %v1548
        %1578 = vmatprep.subr.mxu0 0.0
        %1579 = vmatpush1.msra.mxu0 %v1549
        %1580 = vmatprep.subr.mxu0 0.0
        %1581 = vmatpush1.msra.mxu0 %v1550
        %1582 = vmatprep.subr.mxu0 0.0
        %1583 = vmatpush1.msra.mxu0 %v1551
        %1584 = vmatprep.subr.mxu0 0.0
        %1585 = vmatpush1.msra.mxu0 %v1552
        %1586 = vmatprep.subr.mxu0 0.0
        %1587 = vmatpush1.msra.mxu0 %v1553
        %1588 = vmatprep.subr.mxu0 0.0
        %1589 = vmatpush1.msra.mxu0 %v1554
        %1590 = vmatprep.subr.mxu0 0.0
        %1591 = vmatpush1.msra.mxu0 %v1555
        %1592 = vmatprep.subr.mxu0 0.0
        %1593 = vmatpush1.msra.mxu0 %v1556
        %1594 = vmatprep.subr.mxu0 0.0
        %1595 = vmatpush1.msra.mxu0 %v1557
        %1596 = vmatprep.subr.mxu0 0.0
        %1597 = vmatpush1.msra.mxu0 %v1558
        %1598 = vmatprep.subr.mxu0 0.0
        %1599 = vmatpush1.msra.mxu0 %v1559
        %1600 = vmatprep.subr.mxu0 0.0
        %1601 = vmatpush1.msra.mxu0 0.0
        %1602 = vmatprep.subr.mxu0 0.0
        %1603 = vmatpush1.msra.mxu0 0.0
        %1604 = vmatprep.subr.mxu0 0.0
        %1605 = vmatpush1.msra.mxu0 0.0
        %1606 = vmatprep.subr.mxu0 0.0
        %1607 = vmatpush1.msra.mxu0 0.0
        %1608 = vmatprep.subr.mxu0 0.0
        %1609 = vmatpush1.msra.mxu0 0.0
        %1610 = vmatprep.subr.mxu0 0.0
        %1611 = vmatpush1.msra.mxu0 0.0
        %1612 = vmatprep.subr.mxu0 0.0
        %1613 = vmatpush1.msra.mxu0 0.0
        %1614 = vmatprep.subr.mxu0 0.0
        %1615 = vmatpush1.msra.mxu0 0.0
        %1616 = vmatprep.subr.mxu0 0.0
        %1617 = vmatpush1.msra.mxu0 0.0
        %1618 = vmatprep.subr.mxu0 0.0
        %1619 = vmatpush1.msra.mxu0 0.0
        %1620 = vmatprep.subr.mxu0 0.0
        %1621 = vmatpush1.msra.mxu0 0.0
        %1622 = vmatprep.subr.mxu0 0.0
        %1623 = vmatpush1.msra.mxu0 0.0
        %1624 = vmatprep.mubr.f32.mxu0 %v233
        %1625 = vmatmul.mubr.f32.gmra.mrb[0].mxu0 %v203
        %v1626 = vpop.f32.mrb[0].mxu0
        %v1627 = vadd.f32 0.0, %v1626
        %v1628 = vpop.f32.mrb[0].mxu0
        %1629 = vmatprep.mubr.f32.mxu0 %v236
        %1630 = vmatmul.mubr.f32.gmra.mrb[0].mxu0 %v205
        %v1631 = vpop.f32.mrb[0].mxu0
        %v1632 = vadd.f32 0.0, %v1631
        %v1633 = vpop.f32.mrb[0].mxu0
        %1634 = vmatprep.mubr.f32.mxu0 %v239
        %1635 = vmatmul.mubr.f32.gmra.mrb[0].mxu0 %v207
        %v1636 = vpop.f32.mrb[0].mxu0
        %v1637 = vadd.f32 0.0, %v1636
        %v1638 = vpop.f32.mrb[0].mxu0
        %1639 = vmatprep.mubr.f32.mxu0 %v242
        %1640 = vmatmul.mubr.f32.gmra.mrb[0].mxu0 %v209
        %v1641 = vpop.f32.mrb[0].mxu0
        %v1642 = vadd.f32 0.0, %v1641
        %v1643 = vpop.f32.mrb[0].mxu0
        %1644 = vdwg.mxu0
        %v1645 = vmax.f32 %v1535, %v1627
        %v1646 = vmax.f32 %v1536, %v1632
        %v1647 = vmax.f32 %v1537, %v1637
        %v1648 = vmax.f32 %v1538, %v1642
        %s1649 = scalar_lea.vmem %s176, 416 [#allocation2]
        %v1650 = vld [vmem:[%s1649] sm:$0xff]
        %v1651 = vld [vmem:[%s1649 + $0x8] sm:$0xff]
        %v1652 = vld [vmem:[%s1649 + $0x10] sm:$0xff]
        %v1653 = vld [vmem:[%s1649 + $0x18] sm:$0xff]
        %v1654 = vld [vmem:[%s1649 + $0x20] sm:$0xff]
        %v1655 = vld [vmem:[%s1649 + $0x28] sm:$0xff]
        %v1656 = vld [vmem:[%s1649 + $0x30] sm:$0xff]
        %v1657 = vld [vmem:[%s1649 + $0x38] sm:$0xff]
        %v1658 = vld [vmem:[%s1649 + $0x40] sm:$0xff]
        %v1659 = vld [vmem:[%s1649 + $0x48] sm:$0xff]
        %v1660 = vld [vmem:[%s1649 + $0x50] sm:$0xff]
        %v1661 = vld [vmem:[%s1649 + $0x58] sm:$0xff]
        %v1662 = vld [vmem:[%s1649 + $0x60] sm:$0xff]
        %v1663 = vld [vmem:[%s1649 + $0x68] sm:$0xff]
        %v1664 = vld [vmem:[%s1649 + $0x70] sm:$0xff]
        %v1665 = vld [vmem:[%s1649 + $0x78] sm:$0xff]
        %v1666 = vld [vmem:[%s1649 + $0x80] sm:$0xff]
        %v1667 = vld [vmem:[%s1649 + $0x88] sm:$0xff]
        %v1668 = vld [vmem:[%s1649 + $0x90] sm:$0xff]
        %v1669 = vld [vmem:[%s1649 + $0x98] sm:$0xff]
        %1670 = vmatprep.subr.mxu0 0.0
        %1671 = vmatpush1.msra.mxu0 %v1650
        %1672 = vmatprep.subr.mxu0 0.0
        %1673 = vmatpush1.msra.mxu0 %v1651
        %1674 = vmatprep.subr.mxu0 0.0
        %1675 = vmatpush1.msra.mxu0 %v1652
        %1676 = vmatprep.subr.mxu0 0.0
        %1677 = vmatpush1.msra.mxu0 %v1653
        %1678 = vmatprep.subr.mxu0 0.0
        %1679 = vmatpush1.msra.mxu0 %v1654
        %1680 = vmatprep.subr.mxu0 0.0
        %1681 = vmatpush1.msra.mxu0 %v1655
        %1682 = vmatprep.subr.mxu0 0.0
        %1683 = vmatpush1.msra.mxu0 %v1656
        %1684 = vmatprep.subr.mxu0 0.0
        %1685 = vmatpush1.msra.mxu0 %v1657
        %1686 = vmatprep.subr.mxu0 0.0
        %1687 = vmatpush1.msra.mxu0 %v1658
        %1688 = vmatprep.subr.mxu0 0.0
        %1689 = vmatpush1.msra.mxu0 %v1659
        %1690 = vmatprep.subr.mxu0 0.0
        %1691 = vmatpush1.msra.mxu0 %v1660
        %1692 = vmatprep.subr.mxu0 0.0
        %1693 = vmatpush1.msra.mxu0 %v1661
        %1694 = vmatprep.subr.mxu0 0.0
        %1695 = vmatpush1.msra.mxu0 %v1662
        %1696 = vmatprep.subr.mxu0 0.0
        %1697 = vmatpush1.msra.mxu0 %v1663
        %1698 = vmatprep.subr.mxu0 0.0
        %1699 = vmatpush1.msra.mxu0 %v1664
        %1700 = vmatprep.subr.mxu0 0.0
        %1701 = vmatpush1.msra.mxu0 %v1665
        %1702 = vmatprep.subr.mxu0 0.0
        %1703 = vmatpush1.msra.mxu0 %v1666
        %1704 = vmatprep.subr.mxu0 0.0
        %1705 = vmatpush1.msra.mxu0 %v1667
        %1706 = vmatprep.subr.mxu0 0.0
        %1707 = vmatpush1.msra.mxu0 %v1668
        %1708 = vmatprep.subr.mxu0 0.0
        %1709 = vmatpush1.msra.mxu0 %v1669
        %1710 = vmatprep.subr.mxu0 0.0
        %1711 = vmatpush1.msra.mxu0 0.0
        %1712 = vmatprep.subr.mxu0 0.0
        %1713 = vmatpush1.msra.mxu0 0.0
        %1714 = vmatprep.subr.mxu0 0.0
        %1715 = vmatpush1.msra.mxu0 0.0
        %1716 = vmatprep.subr.mxu0 0.0
        %1717 = vmatpush1.msra.mxu0 0.0
        %1718 = vmatprep.subr.mxu0 0.0
        %1719 = vmatpush1.msra.mxu0 0.0
        %1720 = vmatprep.subr.mxu0 0.0
        %1721 = vmatpush1.msra.mxu0 0.0
        %1722 = vmatprep.subr.mxu0 0.0
        %1723 = vmatpush1.msra.mxu0 0.0
        %1724 = vmatprep.subr.mxu0 0.0
        %1725 = vmatpush1.msra.mxu0 0.0
        %1726 = vmatprep.subr.mxu0 0.0
        %1727 = vmatpush1.msra.mxu0 0.0
        %1728 = vmatprep.subr.mxu0 0.0
        %1729 = vmatpush1.msra.mxu0 0.0
        %1730 = vmatprep.subr.mxu0 0.0
        %1731 = vmatpush1.msra.mxu0 0.0
        %1732 = vmatprep.subr.mxu0 0.0
        %1733 = vmatpush1.msra.mxu0 0.0
        %1734 = vmatprep.mubr.f32.mxu0 %v233
        %1735 = vmatmul.mubr.f32.gmra.mrb[0].mxu0 %v203
        %v1736 = vpop.f32.mrb[0].mxu0
        %v1737 = vadd.f32 0.0, %v1736
        %v1738 = vpop.f32.mrb[0].mxu0
        %1739 = vmatprep.mubr.f32.mxu0 %v236
        %1740 = vmatmul.mubr.f32.gmra.mrb[0].mxu0 %v205
        %v1741 = vpop.f32.mrb[0].mxu0
        %v1742 = vadd.f32 0.0, %v1741
        %v1743 = vpop.f32.mrb[0].mxu0
        %1744 = vmatprep.mubr.f32.mxu0 %v239
        %1745 = vmatmul.mubr.f32.gmra.mrb[0].mxu0 %v207
        %v1746 = vpop.f32.mrb[0].mxu0
        %v1747 = vadd.f32 0.0, %v1746
        %v1748 = vpop.f32.mrb[0].mxu0
        %1749 = vmatprep.mubr.f32.mxu0 %v242
        %1750 = vmatmul.mubr.f32.gmra.mrb[0].mxu0 %v209
        %v1751 = vpop.f32.mrb[0].mxu0
        %v1752 = vadd.f32 0.0, %v1751
        %v1753 = vpop.f32.mrb[0].mxu0
        %1754 = vdwg.mxu0
        %v1755 = vmax.f32 %v1645, %v1737
        %v1756 = vmax.f32 %v1646, %v1742
        %v1757 = vmax.f32 %v1647, %v1747
        %v1758 = vmax.f32 %v1648, %v1752
        %s1759 = scalar_lea.vmem %s176, 448 [#allocation2]
        %v1760 = vld [vmem:[%s1759] sm:$0xff]
        %v1761 = vld [vmem:[%s1759 + $0x8] sm:$0xff]
        %v1762 = vld [vmem:[%s1759 + $0x10] sm:$0xff]
        %v1763 = vld [vmem:[%s1759 + $0x18] sm:$0xff]
        %v1764 = vld [vmem:[%s1759 + $0x20] sm:$0xff]
        %v1765 = vld [vmem:[%s1759 + $0x28] sm:$0xff]
        %v1766 = vld [vmem:[%s1759 + $0x30] sm:$0xff]
        %v1767 = vld [vmem:[%s1759 + $0x38] sm:$0xff]
        %v1768 = vld [vmem:[%s1759 + $0x40] sm:$0xff]
        %v1769 = vld [vmem:[%s1759 + $0x48] sm:$0xff]
        %v1770 = vld [vmem:[%s1759 + $0x50] sm:$0xff]
        %v1771 = vld [vmem:[%s1759 + $0x58] sm:$0xff]
        %v1772 = vld [vmem:[%s1759 + $0x60] sm:$0xff]
        %v1773 = vld [vmem:[%s1759 + $0x68] sm:$0xff]
        %v1774 = vld [vmem:[%s1759 + $0x70] sm:$0xff]
        %v1775 = vld [vmem:[%s1759 + $0x78] sm:$0xff]
        %v1776 = vld [vmem:[%s1759 + $0x80] sm:$0xff]
        %v1777 = vld [vmem:[%s1759 + $0x88] sm:$0xff]
        %v1778 = vld [vmem:[%s1759 + $0x90] sm:$0xff]
        %v1779 = vld [vmem:[%s1759 + $0x98] sm:$0xff]
        %1780 = vmatprep.subr.mxu0 0.0
        %1781 = vmatpush1.msra.mxu0 %v1760
        %1782 = vmatprep.subr.mxu0 0.0
        %1783 = vmatpush1.msra.mxu0 %v1761
        %1784 = vmatprep.subr.mxu0 0.0
        %1785 = vmatpush1.msra.mxu0 %v1762
        %1786 = vmatprep.subr.mxu0 0.0
        %1787 = vmatpush1.msra.mxu0 %v1763
        %1788 = vmatprep.subr.mxu0 0.0
        %1789 = vmatpush1.msra.mxu0 %v1764
        %1790 = vmatprep.subr.mxu0 0.0
        %1791 = vmatpush1.msra.mxu0 %v1765
        %1792 = vmatprep.subr.mxu0 0.0
        %1793 = vmatpush1.msra.mxu0 %v1766
        %1794 = vmatprep.subr.mxu0 0.0
        %1795 = vmatpush1.msra.mxu0 %v1767
        %1796 = vmatprep.subr.mxu0 0.0
        %1797 = vmatpush1.msra.mxu0 %v1768
        %1798 = vmatprep.subr.mxu0 0.0
        %1799 = vmatpush1.msra.mxu0 %v1769
        %1800 = vmatprep.subr.mxu0 0.0
        %1801 = vmatpush1.msra.mxu0 %v1770
        %1802 = vmatprep.subr.mxu0 0.0
        %1803 = vmatpush1.msra.mxu0 %v1771
        %1804 = vmatprep.subr.mxu0 0.0
        %1805 = vmatpush1.msra.mxu0 %v1772
        %1806 = vmatprep.subr.mxu0 0.0
        %1807 = vmatpush1.msra.mxu0 %v1773
        %1808 = vmatprep.subr.mxu0 0.0
        %1809 = vmatpush1.msra.mxu0 %v1774
        %1810 = vmatprep.subr.mxu0 0.0
        %1811 = vmatpush1.msra.mxu0 %v1775
        %1812 = vmatprep.subr.mxu0 0.0
        %1813 = vmatpush1.msra.mxu0 %v1776
        %1814 = vmatprep.subr.mxu0 0.0
        %1815 = vmatpush1.msra.mxu0 %v1777
        %1816 = vmatprep.subr.mxu0 0.0
        %1817 = vmatpush1.msra.mxu0 %v1778
        %1818 = vmatprep.subr.mxu0 0.0
        %1819 = vmatpush1.msra.mxu0 %v1779
        %1820 = vmatprep.subr.mxu0 0.0
        %1821 = vmatpush1.msra.mxu0 0.0
        %1822 = vmatprep.subr.mxu0 0.0
        %1823 = vmatpush1.msra.mxu0 0.0
        %1824 = vmatprep.subr.mxu0 0.0
        %1825 = vmatpush1.msra.mxu0 0.0
        %1826 = vmatprep.subr.mxu0 0.0
        %1827 = vmatpush1.msra.mxu0 0.0
        %1828 = vmatprep.subr.mxu0 0.0
        %1829 = vmatpush1.msra.mxu0 0.0
        %1830 = vmatprep.subr.mxu0 0.0
        %1831 = vmatpush1.msra.mxu0 0.0
        %1832 = vmatprep.subr.mxu0 0.0
        %1833 = vmatpush1.msra.mxu0 0.0
        %1834 = vmatprep.subr.mxu0 0.0
        %1835 = vmatpush1.msra.mxu0 0.0
        %1836 = vmatprep.subr.mxu0 0.0
        %1837 = vmatpush1.msra.mxu0 0.0
        %1838 = vmatprep.subr.mxu0 0.0
        %1839 = vmatpush1.msra.mxu0 0.0
        %1840 = vmatprep.subr.mxu0 0.0
        %1841 = vmatpush1.msra.mxu0 0.0
        %1842 = vmatprep.subr.mxu0 0.0
        %1843 = vmatpush1.msra.mxu0 0.0
        %1844 = vmatprep.mubr.f32.mxu0 %v233
        %1845 = vmatmul.mubr.f32.gmra.mrb[0].mxu0 %v203
        %v1846 = vpop.f32.mrb[0].mxu0
        %v1847 = vadd.f32 0.0, %v1846
        %v1848 = vpop.f32.mrb[0].mxu0
        %1849 = vmatprep.mubr.f32.mxu0 %v236
        %1850 = vmatmul.mubr.f32.gmra.mrb[0].mxu0 %v205
        %v1851 = vpop.f32.mrb[0].mxu0
        %v1852 = vadd.f32 0.0, %v1851
        %v1853 = vpop.f32.mrb[0].mxu0
        %1854 = vmatprep.mubr.f32.mxu0 %v239
        %1855 = vmatmul.mubr.f32.gmra.mrb[0].mxu0 %v207
        %v1856 = vpop.f32.mrb[0].mxu0
        %v1857 = vadd.f32 0.0, %v1856
        %v1858 = vpop.f32.mrb[0].mxu0
        %1859 = vmatprep.mubr.f32.mxu0 %v242
        %1860 = vmatmul.mubr.f32.gmra.mrb[0].mxu0 %v209
        %v1861 = vpop.f32.mrb[0].mxu0
        %v1862 = vadd.f32 0.0, %v1861
        %v1863 = vpop.f32.mrb[0].mxu0
        %1864 = vdwg.mxu0
        %v1865 = vmax.f32 %v1755, %v1847
        %v1866 = vmax.f32 %v1756, %v1852
        %v1867 = vmax.f32 %v1757, %v1857
        %v1868 = vmax.f32 %v1758, %v1862
        %s1869 = scalar_lea.vmem %s176, 480 [#allocation2]
        %v1870 = vld [vmem:[%s1869] sm:$0xff]
        %v1871 = vld [vmem:[%s1869 + $0x8] sm:$0xff]
        %v1872 = vld [vmem:[%s1869 + $0x10] sm:$0xff]
        %v1873 = vld [vmem:[%s1869 + $0x18] sm:$0xff]
        %v1874 = vld [vmem:[%s1869 + $0x20] sm:$0xff]
        %v1875 = vld [vmem:[%s1869 + $0x28] sm:$0xff]
        %v1876 = vld [vmem:[%s1869 + $0x30] sm:$0xff]
        %v1877 = vld [vmem:[%s1869 + $0x38] sm:$0xff]
        %v1878 = vld [vmem:[%s1869 + $0x40] sm:$0xff]
        %v1879 = vld [vmem:[%s1869 + $0x48] sm:$0xff]
        %v1880 = vld [vmem:[%s1869 + $0x50] sm:$0xff]
        %v1881 = vld [vmem:[%s1869 + $0x58] sm:$0xff]
        %v1882 = vld [vmem:[%s1869 + $0x60] sm:$0xff]
        %v1883 = vld [vmem:[%s1869 + $0x68] sm:$0xff]
        %v1884 = vld [vmem:[%s1869 + $0x70] sm:$0xff]
        %v1885 = vld [vmem:[%s1869 + $0x78] sm:$0xff]
        %v1886 = vld [vmem:[%s1869 + $0x80] sm:$0xff]
        %v1887 = vld [vmem:[%s1869 + $0x88] sm:$0xff]
        %v1888 = vld [vmem:[%s1869 + $0x90] sm:$0xff]
        %v1889 = vld [vmem:[%s1869 + $0x98] sm:$0xff]
        %1890 = vmatprep.subr.mxu0 0.0
        %1891 = vmatpush1.msra.mxu0 %v1870
        %1892 = vmatprep.subr.mxu0 0.0
        %1893 = vmatpush1.msra.mxu0 %v1871
        %1894 = vmatprep.subr.mxu0 0.0
        %1895 = vmatpush1.msra.mxu0 %v1872
        %1896 = vmatprep.subr.mxu0 0.0
        %1897 = vmatpush1.msra.mxu0 %v1873
        %1898 = vmatprep.subr.mxu0 0.0
        %1899 = vmatpush1.msra.mxu0 %v1874
        %1900 = vmatprep.subr.mxu0 0.0
        %1901 = vmatpush1.msra.mxu0 %v1875
        %1902 = vmatprep.subr.mxu0 0.0
        %1903 = vmatpush1.msra.mxu0 %v1876
        %1904 = vmatprep.subr.mxu0 0.0
        %1905 = vmatpush1.msra.mxu0 %v1877
        %1906 = vmatprep.subr.mxu0 0.0
        %1907 = vmatpush1.msra.mxu0 %v1878
        %1908 = vmatprep.subr.mxu0 0.0
        %1909 = vmatpush1.msra.mxu0 %v1879
        %1910 = vmatprep.subr.mxu0 0.0
        %1911 = vmatpush1.msra.mxu0 %v1880
        %1912 = vmatprep.subr.mxu0 0.0
        %1913 = vmatpush1.msra.mxu0 %v1881
        %1914 = vmatprep.subr.mxu0 0.0
        %1915 = vmatpush1.msra.mxu0 %v1882
        %1916 = vmatprep.subr.mxu0 0.0
        %1917 = vmatpush1.msra.mxu0 %v1883
        %1918 = vmatprep.subr.mxu0 0.0
        %1919 = vmatpush1.msra.mxu0 %v1884
        %1920 = vmatprep.subr.mxu0 0.0
        %1921 = vmatpush1.msra.mxu0 %v1885
        %1922 = vmatprep.subr.mxu0 0.0
        %1923 = vmatpush1.msra.mxu0 %v1886
        %1924 = vmatprep.subr.mxu0 0.0
        %1925 = vmatpush1.msra.mxu0 %v1887
        %1926 = vmatprep.subr.mxu0 0.0
        %1927 = vmatpush1.msra.mxu0 %v1888
        %1928 = vmatprep.subr.mxu0 0.0
        %1929 = vmatpush1.msra.mxu0 %v1889
        %1930 = vmatprep.subr.mxu0 0.0
        %1931 = vmatpush1.msra.mxu0 0.0
        %1932 = vmatprep.subr.mxu0 0.0
        %1933 = vmatpush1.msra.mxu0 0.0
        %1934 = vmatprep.subr.mxu0 0.0
        %1935 = vmatpush1.msra.mxu0 0.0
        %1936 = vmatprep.subr.mxu0 0.0
        %1937 = vmatpush1.msra.mxu0 0.0
        %1938 = vmatprep.subr.mxu0 0.0
        %1939 = vmatpush1.msra.mxu0 0.0
        %1940 = vmatprep.subr.mxu0 0.0
        %1941 = vmatpush1.msra.mxu0 0.0
        %1942 = vmatprep.subr.mxu0 0.0
        %1943 = vmatpush1.msra.mxu0 0.0
        %1944 = vmatprep.subr.mxu0 0.0
        %1945 = vmatpush1.msra.mxu0 0.0
        %1946 = vmatprep.subr.mxu0 0.0
        %1947 = vmatpush1.msra.mxu0 0.0
        %1948 = vmatprep.subr.mxu0 0.0
        %1949 = vmatpush1.msra.mxu0 0.0
        %1950 = vmatprep.subr.mxu0 0.0
        %1951 = vmatpush1.msra.mxu0 0.0
        %1952 = vmatprep.subr.mxu0 0.0
        %1953 = vmatpush1.msra.mxu0 0.0
        %1954 = vmatprep.mubr.f32.mxu0 %v233
        %1955 = vmatmul.mubr.f32.gmra.mrb[0].mxu0 %v203
        %v1956 = vpop.f32.mrb[0].mxu0
        %v1957 = vadd.f32 0.0, %v1956
        %v1958 = vpop.f32.mrb[0].mxu0
        %1959 = vmatprep.mubr.f32.mxu0 %v236
        %1960 = vmatmul.mubr.f32.gmra.mrb[0].mxu0 %v205
        %v1961 = vpop.f32.mrb[0].mxu0
        %v1962 = vadd.f32 0.0, %v1961
        %v1963 = vpop.f32.mrb[0].mxu0
        %1964 = vmatprep.mubr.f32.mxu0 %v239
        %1965 = vmatmul.mubr.f32.gmra.mrb[0].mxu0 %v207
        %v1966 = vpop.f32.mrb[0].mxu0
        %v1967 = vadd.f32 0.0, %v1966
        %v1968 = vpop.f32.mrb[0].mxu0
        %1969 = vmatprep.mubr.f32.mxu0 %v242
        %1970 = vmatmul.mubr.f32.gmra.mrb[0].mxu0 %v209
        %v1971 = vpop.f32.mrb[0].mxu0
        %v1972 = vadd.f32 0.0, %v1971
        %v1973 = vpop.f32.mrb[0].mxu0
        %1974 = vdwg.mxu0
        %v1975 = vmax.f32 %v1865, %v1957
        %v1976 = vmax.f32 %v1866, %v1962
        %v1977 = vmax.f32 %v1867, %v1967
        %v1978 = vmax.f32 %v1868, %v1972
        %s1979 = scalar_lea.vmem %s176, 512 [#allocation2]
        %v1980 = vld [vmem:[%s1979] sm:$0xff]
        %v1981 = vld [vmem:[%s1979 + $0x8] sm:$0xff]
        %v1982 = vld [vmem:[%s1979 + $0x10] sm:$0xff]
        %v1983 = vld [vmem:[%s1979 + $0x18] sm:$0xff]
        %v1984 = vld [vmem:[%s1979 + $0x20] sm:$0xff]
        %v1985 = vld [vmem:[%s1979 + $0x28] sm:$0xff]
        %v1986 = vld [vmem:[%s1979 + $0x30] sm:$0xff]
        %v1987 = vld [vmem:[%s1979 + $0x38] sm:$0xff]
        %v1988 = vld [vmem:[%s1979 + $0x40] sm:$0xff]
        %v1989 = vld [vmem:[%s1979 + $0x48] sm:$0xff]
        %v1990 = vld [vmem:[%s1979 + $0x50] sm:$0xff]
        %v1991 = vld [vmem:[%s1979 + $0x58] sm:$0xff]
        %v1992 = vld [vmem:[%s1979 + $0x60] sm:$0xff]
        %v1993 = vld [vmem:[%s1979 + $0x68] sm:$0xff]
        %v1994 = vld [vmem:[%s1979 + $0x70] sm:$0xff]
        %v1995 = vld [vmem:[%s1979 + $0x78] sm:$0xff]
        %v1996 = vld [vmem:[%s1979 + $0x80] sm:$0xff]
        %v1997 = vld [vmem:[%s1979 + $0x88] sm:$0xff]
        %v1998 = vld [vmem:[%s1979 + $0x90] sm:$0xff]
        %v1999 = vld [vmem:[%s1979 + $0x98] sm:$0xff]
        %2000 = vmatprep.subr.mxu0 0.0
        %2001 = vmatpush1.msra.mxu0 %v1980
        %2002 = vmatprep.subr.mxu0 0.0
        %2003 = vmatpush1.msra.mxu0 %v1981
        %2004 = vmatprep.subr.mxu0 0.0
        %2005 = vmatpush1.msra.mxu0 %v1982
        %2006 = vmatprep.subr.mxu0 0.0
        %2007 = vmatpush1.msra.mxu0 %v1983
        %2008 = vmatprep.subr.mxu0 0.0
        %2009 = vmatpush1.msra.mxu0 %v1984
        %2010 = vmatprep.subr.mxu0 0.0
        %2011 = vmatpush1.msra.mxu0 %v1985
        %2012 = vmatprep.subr.mxu0 0.0
        %2013 = vmatpush1.msra.mxu0 %v1986
        %2014 = vmatprep.subr.mxu0 0.0
        %2015 = vmatpush1.msra.mxu0 %v1987
        %2016 = vmatprep.subr.mxu0 0.0
        %2017 = vmatpush1.msra.mxu0 %v1988
        %2018 = vmatprep.subr.mxu0 0.0
        %2019 = vmatpush1.msra.mxu0 %v1989
        %2020 = vmatprep.subr.mxu0 0.0
        %2021 = vmatpush1.msra.mxu0 %v1990
        %2022 = vmatprep.subr.mxu0 0.0
        %2023 = vmatpush1.msra.mxu0 %v1991
        %2024 = vmatprep.subr.mxu0 0.0
        %2025 = vmatpush1.msra.mxu0 %v1992
        %2026 = vmatprep.subr.mxu0 0.0
        %2027 = vmatpush1.msra.mxu0 %v1993
        %2028 = vmatprep.subr.mxu0 0.0
        %2029 = vmatpush1.msra.mxu0 %v1994
        %2030 = vmatprep.subr.mxu0 0.0
        %2031 = vmatpush1.msra.mxu0 %v1995
        %2032 = vmatprep.subr.mxu0 0.0
        %2033 = vmatpush1.msra.mxu0 %v1996
        %2034 = vmatprep.subr.mxu0 0.0
        %2035 = vmatpush1.msra.mxu0 %v1997
        %2036 = vmatprep.subr.mxu0 0.0
        %2037 = vmatpush1.msra.mxu0 %v1998
        %2038 = vmatprep.subr.mxu0 0.0
        %2039 = vmatpush1.msra.mxu0 %v1999
        %2040 = vmatprep.subr.mxu0 0.0
        %2041 = vmatpush1.msra.mxu0 0.0
        %2042 = vmatprep.subr.mxu0 0.0
        %2043 = vmatpush1.msra.mxu0 0.0
        %2044 = vmatprep.subr.mxu0 0.0
        %2045 = vmatpush1.msra.mxu0 0.0
        %2046 = vmatprep.subr.mxu0 0.0
        %2047 = vmatpush1.msra.mxu0 0.0
        %2048 = vmatprep.subr.mxu0 0.0
        %2049 = vmatpush1.msra.mxu0 0.0
        %2050 = vmatprep.subr.mxu0 0.0
        %2051 = vmatpush1.msra.mxu0 0.0
        %2052 = vmatprep.subr.mxu0 0.0
        %2053 = vmatpush1.msra.mxu0 0.0
        %2054 = vmatprep.subr.mxu0 0.0
        %2055 = vmatpush1.msra.mxu0 0.0
        %2056 = vmatprep.subr.mxu0 0.0
        %2057 = vmatpush1.msra.mxu0 0.0
        %2058 = vmatprep.subr.mxu0 0.0
        %2059 = vmatpush1.msra.mxu0 0.0
        %2060 = vmatprep.subr.mxu0 0.0
        %2061 = vmatpush1.msra.mxu0 0.0
        %2062 = vmatprep.subr.mxu0 0.0
        %2063 = vmatpush1.msra.mxu0 0.0
        %2064 = vmatprep.mubr.f32.mxu0 %v233
        %2065 = vmatmul.mubr.f32.gmra.mrb[0].mxu0 %v203
        %v2066 = vpop.f32.mrb[0].mxu0
        %v2067 = vadd.f32 0.0, %v2066
        %v2068 = vpop.f32.mrb[0].mxu0
        %2069 = vmatprep.mubr.f32.mxu0 %v236
        %2070 = vmatmul.mubr.f32.gmra.mrb[0].mxu0 %v205
        %v2071 = vpop.f32.mrb[0].mxu0
        %v2072 = vadd.f32 0.0, %v2071
        %v2073 = vpop.f32.mrb[0].mxu0
        %2074 = vmatprep.mubr.f32.mxu0 %v239
        %2075 = vmatmul.mubr.f32.gmra.mrb[0].mxu0 %v207
        %v2076 = vpop.f32.mrb[0].mxu0
        %v2077 = vadd.f32 0.0, %v2076
        %v2078 = vpop.f32.mrb[0].mxu0
        %2079 = vmatprep.mubr.f32.mxu0 %v242
        %2080 = vmatmul.mubr.f32.gmra.mrb[0].mxu0 %v209
        %v2081 = vpop.f32.mrb[0].mxu0
        %v2082 = vadd.f32 0.0, %v2081
        %v2083 = vpop.f32.mrb[0].mxu0
        %2084 = vdwg.mxu0
        %v2085 = vmax.f32 %v1975, %v2067
        %v2086 = vmax.f32 %v1976, %v2072
        %v2087 = vmax.f32 %v1977, %v2077
        %v2088 = vmax.f32 %v1978, %v2082
        %v2089 = vld [vmem:[%s2] sm:$0xff]
        %v2090 = vld [vmem:[%s2 + $0x8] sm:$0xff]
        %v2091 = vld [vmem:[%s2 + $0x10] sm:$0xff]
        %v2092 = vld [vmem:[%s2 + $0x18] sm:$0xff]
        %2094 = vset.pattern.permute.xlu0 0
        %2095 = vperm.xlu0 %2094, %v2089
        %v2096 = vpop.permute.xlu0 %2095
        %2099 = vset.pattern.permute.xlu0 0
        %2100 = vperm.xlu0 %2099, %v2090
        %v2101 = vpop.permute.xlu0 %2100
        %2104 = vset.pattern.permute.xlu0 0
        %2105 = vperm.xlu0 %2104, %v2091
        %v2106 = vpop.permute.xlu0 %2105
        %2109 = vset.pattern.permute.xlu0 0
        %2110 = vperm.xlu0 %2109, %v2092
        %v2111 = vpop.permute.xlu0 %2110
        %v2113 = vadd.f32 %v2085, %v2096
        %v2114 = vadd.f32 %v2086, %v2101
        %v2115 = vadd.f32 %v2087, %v2106
        %v2116 = vadd.f32 %v2088, %v2111
        %v2117 = vmax.f32 %v2113, 0.0
        %v2118 = vmax.f32 %v2114, 0.0
        %v2119 = vmax.f32 %v2115, 0.0
        %v2120 = vmax.f32 %v2116, 0.0
        %2121 = vst [vmem:[%s202] sm:$0xff] %v2117
        %2122 = vst [vmem:[%s202 + $0x8] sm:$0xff] %v2118
        %2123 = vst [vmem:[%s202 + $0x10] sm:$0xff] %v2119
        %2124 = vst [vmem:[%s202 + $0x18] sm:$0xff] %v2120
        %s2125 = sand.u32 %s97, 1
        %s2126 = scalar_lea.sflag [#allocation4], %s2125
        %s2127 = sand.u32 %s97, 1
        %s2128 = smul.addr %s2127, 32
        %s2129 = scalar_lea.vmem [#allocation7], %s2128
        // Predicated region
        $region41: #{tpu_custom_call.1} parent=31 // pred_check
          %p2130 = pneg %p107
        $region42: #{tpu_custom_call.1} parent=31 // pred_check_branch
          %2132 = sbr.rel (%p2130) target = $region44
        $region43: #{tpu_custom_call.1} parent=31 // pred_region
          %s2134 = ssub.s32 512, 512
          %2135 = vsyncadd %s2126, %s2134
          %s2136 = smul.addr %s21, 128
          %s2137 = scalar_lea.hbm %s3, %s2136
          %s2138 = sshll.u32 %s2129, 4
          %s2139 = int_to_ptr.vmem [resolvable:$true] %s2138
          %2144 = dma.vmem_to_hbm [thread:$0]  %s2139, 512, %s2137, %s2126, 128, 256, 8
        $region44: #{tpu_custom_call.1} parent=31 // pred_fallthru
          _
      $region32: #{tpu_custom_call.1} parent=5 // pred_fallthru
        _
      %p2145 = scmp.le.s32.totalorder 2, %s16
      // Predicated region
      $region45: #{tpu_custom_call.1} parent=5 // pred_check
        %p2146 = pneg %p2145
      $region46: #{tpu_custom_call.1} parent=5 // pred_check_branch
        %2148 = sbr.rel (%p2146) target = $region48
      $region47: #{tpu_custom_call.1} parent=5 // pred_region
        %s2149 = ssub.s32 %s16, 2
        // Predicated region
        $region49: #{tpu_custom_call.1} parent=47 // pred_check
          %p2150 = pneg %p113
        $region50: #{tpu_custom_call.1} parent=47 // pred_check_branch
          %2152 = sbr.rel (%p2150) target = $region52
        $region51: #{tpu_custom_call.1} parent=47 // pred_region
          %s2153 = sand.u32 %s98, 1
          %s2154 = scalar_lea.sflag [#allocation4], %s2153
          %s2155 = sand.u32 %s98, 1
          %s2156 = smul.addr %s2155, 32
          %s2157 = scalar_lea.vmem [#allocation7], %s2156
          %2158 = dma.done %s2154, 512
        $region52: #{tpu_custom_call.1} parent=47 // pred_fallthru
          _
      $region48: #{tpu_custom_call.1} parent=5 // pred_fallthru
        _
    $region6: #{tpu_custom_call.1} parent=1 // loop_footer
      %s20 = sadd.s32 1, %s16
    $region7: #{tpu_custom_call.1} parent=1 // loop_footer_branch
      %15 = sbr.rel target = $region3
    $region8: #{tpu_custom_call.1} parent=1 // loop_exit
      _
    %2159 = vsyncpa [#allocation3], 1
    %s2160 = scalar_lea.sflag [#allocation3], 1
    %2161 = vsyncpa %s2160, 1
    %2162 = vsyncpa [#allocation6], 1
    %2163 = vsyncpa [#allocation4], 1
    %s2164 = scalar_lea.sflag [#allocation4], 1
    %2165 = vsyncpa %s2164, 1

</llo_original>
